<compile_context>
chip_gen: v5e
topology: v5e:2x2
jax: 0.10.0
libtpu: 0.0.40
codegen_flags: <defaults>
</compile_context>

<pallas_src>
import functools

import jax
import jax.numpy as jnp
from jax import lax
from jax.experimental import pallas as pl
from jax.experimental.pallas import tpu as pltpu

_MIB = 1024 * 1024


def cross_attention_kernel(x_ref, y_ref, wq_ref, wk_ref, wv_ref, wo_ref,
                           bo_ref, o_ref, k_scr, v_scr, *, heads, dim_head):
    """One (batch, query-tile) per grid step.

    x_ref : [1, tq, C] query features (current query tile)
    y_ref : [1, M,  C] key/value features for the current batch row (Pallas
                       only re-DMAs it when the batch index changes)
    wq/wk/wv/wo_ref : [C, C] projection weights, pre-transposed ([in, out])
    bo_ref : [1, C]    out_proj bias
    o_ref  : [1, tq, C] output
    k_scr/v_scr : [M, C] VMEM scratch with the projected K/V for the current
                  batch row (compute dtype), filled once per batch row.
    """
    cdt = x_ref.dtype                       # compute dtype = caller's dtype

    # ---- K/V projection: once per batch row, not once per query tile. -----
    # The q-tile axis is the innermost grid axis and is "arbitrary", so the
    # scratch written at i == 0 stays valid for every query tile of this row.
    @pl.when(pl.program_id(1) == 0)
    def _():
        y = y_ref[0]                                               # [M, C]
        k_scr[...] = jnp.dot(y, wk_ref[...],
                             preferred_element_type=jnp.float32).astype(cdt)
        v_scr[...] = jnp.dot(y, wv_ref[...],
                             preferred_element_type=jnp.float32).astype(cdt)

    scale = dim_head ** (-0.5)
    x = x_ref[0]                                                   # [tq, C]

    # Q projection (bias=False in the PyTorch module), pre-scaled once on the
    # [tq, C] tensor instead of scaling every [tq, M] score block.
    q = (jnp.dot(x, wq_ref[...], preferred_element_type=jnp.float32)
         * scale).astype(cdt)                                      # [tq, C]
    k = k_scr[...]                                                 # [M,  C]
    v = v_scr[...]                                                 # [M,  C]

    # heads is small & static -> unrolled Python loop.
    ctx_heads = []
    for h in range(heads):
        sl = slice(h * dim_head, (h + 1) * dim_head)
        qh = q[:, sl]                                              # [tq, dh]
        kh = k[:, sl]                                              # [M,  dh]
        vh = v[:, sl]                                              # [M,  dh]

        # Scores: contract dim_head on both operands (no kh.T transpose).
        s = lax.dot_general(qh, kh,
                            dimension_numbers=(((1,), (1,)), ((), ())),
                            preferred_element_type=jnp.float32)    # [tq, M]

        s_max = jnp.max(s, axis=-1, keepdims=True)
        p = jnp.exp(s - s_max)                                     # [tq, M]
        row_sum = jnp.sum(p, axis=-1, keepdims=True)               # [tq, 1]

        # Unnormalized context first; deferred normalization multiplies the
        # small [tq, dh] tensor instead of the [tq, M] probabilities.
        ctx = jnp.dot(p.astype(cdt), vh,
                      preferred_element_type=jnp.float32)          # [tq, dh]
        ctx = ctx * pl.reciprocal(row_sum, approx=True)            # EUP slot
        ctx_heads.append(ctx.astype(cdt))

    # Single wide output projection (K = C) instead of `heads` K = dim_head
    # matmuls folded into an f32 accumulator.
    ctx_full = jnp.concatenate(ctx_heads, axis=-1)                 # [tq, C]
    out = jnp.dot(ctx_full, wo_ref[...],
                  preferred_element_type=jnp.float32)              # [tq, C]
    out = out + bo_ref[...].astype(jnp.float32)                    # bias
    o_ref[0] = out.astype(o_ref.dtype)


def _tpu_vmem_capacity_bytes():
    """Physical VMEM per TensorCore; conservative default if unavailable."""
    try:
        return int(pltpu.get_tpu_info().vmem_capacity_bytes)
    except Exception:
        return 64 * _MIB            # v7x per-TC size: safe lower bound


def _pick_q_tile(n, cap):
    """Largest query tile <= cap that divides N; prefers 128-aligned tiles
    (full MXU rows on v5e), then any multiple of 8 (sublane constraint)."""
    if n <= cap:
        return n
    for t in range(cap - cap % 128, 0, -128):
        if n % t == 0:
            return t
    for t in range(cap - cap % 8, 0, -8):
        if n % t == 0:
            return t
    # TODO(synk): N > cap with no multiple-of-8 divisor reverts to untiled
    # queries; padding N to a multiple of 8 would be better for large ragged N.
    return n


def _make_specs(C, M, q_tile, single_buffer_weights):
    def const_spec(shape):
        # Grid-invariant operands (constant index_map): request a single VMEM
        # buffer instead of the default double buffer.
        if single_buffer_weights:
            return pl.BlockSpec(shape, lambda b, i: (0,) * len(shape),
                                pipeline_mode=pl.Buffered(1))
        return pl.BlockSpec(shape, lambda b, i: (0,) * len(shape))

    in_specs = [
        pl.BlockSpec((1, q_tile, C), lambda b, i: (b, i, 0)),   # x (per tile)
        pl.BlockSpec((1, M, C), lambda b, i: (b, 0, 0)),        # y (per batch)
        const_spec((C, C)),                                     # wq
        const_spec((C, C)),                                     # wk
        const_spec((C, C)),                                     # wv
        const_spec((C, C)),                                     # wo
        const_spec((1, C)),                                     # bo
    ]
    out_specs = pl.BlockSpec((1, q_tile, C), lambda b, i: (b, i, 0))
    return in_specs, out_specs


def _build_call(B, N, M, C, heads, dim_head, q_tile, dtype,
                single_buffer_weights):
    kernel = functools.partial(cross_attention_kernel, heads=heads,
                               dim_head=dim_head)
    in_specs, out_specs = _make_specs(C, M, q_tile, single_buffer_weights)

    itemsize = jnp.dtype(dtype).itemsize
    # q proj + out proj + k/v proj + attention (scores + PV).
    flops = 4 * B * N * C * C + 4 * B * M * C * C + 4 * B * N * M * C
    transcendentals = B * heads * N * M                      # softmax exps
    bytes_accessed = itemsize * (2 * B * N * C + B * M * C + 4 * C * C + C)

    vmem_cap = _tpu_vmem_capacity_bytes()
    # ~55% of physical VMEM, capped at 48 MiB (fits v5e/v6e's 128 MiB and
    # leaves headroom on v7x's 64 MiB parts, ~35 MiB there).
    vmem_limit = min(48 * _MIB, int(vmem_cap * 0.55))

    return pl.pallas_call(
        kernel,
        out_shape=jax.ShapeDtypeStruct((B, N, C), dtype),
        grid_spec=pltpu.PrefetchScalarGridSpec(
            num_scalar_prefetch=0,
            grid=(B, N // q_tile),
            in_specs=in_specs,
            out_specs=out_specs,
            scratch_shapes=[
                pltpu.VMEM((M, C), dtype),   # projected K, current batch row
                pltpu.VMEM((M, C), dtype),   # projected V, current batch row
            ],
        ),
        compiler_params=pltpu.CompilerParams(
            # Batch leading & "parallel" so it carries the megacore split on
            # v7x (needs B >= 2); the q-tile axis must be "arbitrary" because
            # the K/V scratch written at i == 0 is reused by later q tiles.
            dimension_semantics=("parallel", "arbitrary"),
            vmem_limit_bytes=vmem_limit,
        ),
        cost_estimate=pl.CostEstimate(flops=flops,
                                      transcendentals=transcendentals,
                                      bytes_accessed=bytes_accessed),
    )


def cross_attention(x, y, wq, wk, wv, wo, bo, *, heads, q_tile=None,
                    compute_dtype=None):
    """x: [B, N, C], y: [B, M, C]; w*: [C, C] (PyTorch layout [out, in]); bo: [C].

    compute_dtype: optional dtype (e.g. jnp.bfloat16) to cast operands to;
    bf16 operands run the MXU at bf16 rates, accumulation stays f32.
    """
    if compute_dtype is not None:
        x, y = x.astype(compute_dtype), y.astype(compute_dtype)
        wq, wk, wv, wo = (w.astype(compute_dtype) for w in (wq, wk, wv, wo))
        bo = bo.astype(compute_dtype)

    B, N, C = x.shape
    _, M, _ = y.shape
    assert C % heads == 0, "dim must be divisible by heads"
    dim_head = C // heads

    vmem_cap = _tpu_vmem_capacity_bytes()
    q_cap = 256 if vmem_cap <= 64 * _MIB else 512      # smaller tiles on v7x
    if q_tile is None:
        q_tile = _pick_q_tile(N, q_cap)
    assert N % q_tile == 0, "q_tile must divide N"

    # Transpose weights once so the kernel does plain x @ W_t (matches
    # PyTorch's x @ W.T); weights keep the caller dtype.
    wq_t, wk_t, wv_t, wo_t = wq.T, wk.T, wv.T, wo.T
    bo2 = bo.reshape(1, C)

    args = (x, y, wq_t, wk_t, wv_t, wo_t, bo2)
    try:
        call = _build_call(B, N, M, C, heads, dim_head, q_tile, x.dtype,
                           single_buffer_weights=True)
        return call(*args)
    except Exception:
        # pipeline_mode=pl.Buffered(1) (single-buffered grid-invariant
        # weights) is a newer Pallas feature; fall back to the default
        # double-buffered weight specs if this JAX/Mosaic rejects it.
        call = _build_call(B, N, M, C, heads, dim_head, q_tile, x.dtype,
                           single_buffer_weights=False)
        return call(*args)


def cross_attention_ref(x, y, wq, wk, wv, wo, bo, *, heads):
    """Pure-JAX reference matching the PyTorch forward (eval mode)."""
    B, N, C = x.shape
    _, M, _ = y.shape
    dh = C // heads
    scale = dh ** (-0.5)
    q = (x @ wq.T).reshape(B, N, heads, dh).transpose(0, 2, 1, 3)
    k = (y @ wk.T).reshape(B, M, heads, dh).transpose(0, 2, 1, 3)
    v = (y @ wv.T).reshape(B, M, heads, dh).transpose(0, 2, 1, 3)
    attn = jax.nn.softmax(jnp.einsum('bhnd,bhmd->bhnm', q, k) * scale, axis=-1)
    out = jnp.einsum('bhnm,bhmd->bhnd', attn, v)
    out = out.transpose(0, 2, 1, 3).reshape(B, N, C)
    return out @ wo.T + bo


if __name__ == "__main__":
    B, N, M, C, heads = 2, 16, 8, 32, 4

    key = jax.random.PRNGKey(0)
    kx, ky, kq, kk, kv, ko, kb = jax.random.split(key, 7)

    x = jax.random.normal(kx, (B, N, C), dtype=jnp.float32)
    y = jax.random.normal(ky, (B, M, C), dtype=jnp.float32)

    # Deterministic parameter init (PyTorch layout: [out_features, in_features]).
    bound = 1.0 / (C ** 0.5)
    wq = jax.random.uniform(kq, (C, C), minval=-bound, maxval=bound, dtype=jnp.float32)
    wk = jax.random.uniform(kk, (C, C), minval=-bound, maxval=bound, dtype=jnp.float32)
    wv = jax.random.uniform(kv, (C, C), minval=-bound, maxval=bound, dtype=jnp.float32)
    wo = jax.random.uniform(ko, (C, C), minval=-bound, maxval=bound, dtype=jnp.float32)
    bo = jax.random.uniform(kb, (C,), minval=-bound, maxval=bound, dtype=jnp.float32)

    ref = cross_attention_ref(x, y, wq, wk, wv, wo, bo, heads=heads)

    # Default tiling (single q tile per batch row at this small N).
    out = cross_attention(x, y, wq, wk, wv, wo, bo, heads=heads)
    out = jax.block_until_ready(out)
    assert out.shape == (B, N, C)
    # Tolerance slightly loosened vs exact: approx reciprocal (EUP vrcp) in
    # the deferred softmax normalization introduces ~1e-4-level error.
    assert jnp.allclose(out, ref, atol=5e-3, rtol=5e-3), "mismatch vs reference"

    # Forced multi-tile run (q_tile=8 -> 2 query tiles per batch row) to
    # exercise the once-per-batch K/V scratch caching across query tiles.
    out_tiled = cross_attention(x, y, wq, wk, wv, wo, bo, heads=heads, q_tile=8)
    out_tiled = jax.block_until_ready(out_tiled)
    assert jnp.allclose(out_tiled, ref, atol=5e-3, rtol=5e-3), \
        "mismatch vs reference (tiled q, cached K/V)"

    print("KERNEL_OK")
</pallas_src>

<mosaic_0001>
module attributes {stable_mosaic.version = 11 : i64} {
  func.func @cross_attention_kernel(%arg0: i32, %arg1: i32, %arg2: memref<1x16x32xf32, #tpu.memory_space<vmem>>, %arg3: memref<1x8x32xf32, #tpu.memory_space<vmem>>, %arg4: memref<32x32xf32, #tpu.memory_space<vmem>>, %arg5: memref<32x32xf32, #tpu.memory_space<vmem>>, %arg6: memref<32x32xf32, #tpu.memory_space<vmem>>, %arg7: memref<32x32xf32, #tpu.memory_space<vmem>>, %arg8: memref<1x32xf32, #tpu.memory_space<vmem>>, %arg9: memref<1x16x32xf32, #tpu.memory_space<vmem>>, %arg10: memref<8x32xf32, #tpu.memory_space<vmem>>, %arg11: memref<8x32xf32, #tpu.memory_space<vmem>>) attributes {dimension_semantics = [#tpu.dimension_semantics<parallel>, #tpu.dimension_semantics<arbitrary>], iteration_bounds = array<i64: 2, 1>, scalar_prefetch = 0 : i64, scratch_operands = 2 : i64, tpu.core_type = #tpu.core_type<tc>, window_params = [{transform_indices = @transform_0, window_bounds = array<i64: 1, 16, 32>}, {transform_indices = @transform_1, window_bounds = array<i64: 1, 8, 32>}, {pipeline_mode = #tpu.pipeline_mode<synchronous>, transform_indices = @transform_2, window_bounds = array<i64: 32, 32>}, {pipeline_mode = #tpu.pipeline_mode<synchronous>, transform_indices = @transform_3, window_bounds = array<i64: 32, 32>}, {pipeline_mode = #tpu.pipeline_mode<synchronous>, transform_indices = @transform_4, window_bounds = array<i64: 32, 32>}, {pipeline_mode = #tpu.pipeline_mode<synchronous>, transform_indices = @transform_5, window_bounds = array<i64: 32, 32>}, {pipeline_mode = #tpu.pipeline_mode<synchronous>, transform_indices = @transform_6, window_bounds = array<i64: 1, 32>}, {transform_indices = @transform_7, window_bounds = array<i64: 1, 16, 32>}]} {
    %c0_i32 = arith.constant 0 : i32
    %0 = arith.cmpi eq, %arg1, %c0_i32 : i32
    %1 = arith.extui %0 : i1 to i32
    %c0_i32_0 = arith.constant 0 : i32
    %2 = arith.cmpi ne, %1, %c0_i32_0 : i32
    scf.if %2 {
      %c0_34 = arith.constant 0 : index
      %c0_35 = arith.constant 0 : index
      %c0_36 = arith.constant 0 : index
      %80 = vector.load %arg3[%c0_34, %c0_35, %c0_36] : memref<1x8x32xf32, #tpu.memory_space<vmem>>, vector<1x8x32xf32>
      %81 = vector.shape_cast %80 : vector<1x8x32xf32> to vector<8x32xf32>
      %c0_37 = arith.constant 0 : index
      %c0_38 = arith.constant 0 : index
      %82 = vector.load %arg5[%c0_37, %c0_38] : memref<32x32xf32, #tpu.memory_space<vmem>>, vector<32x32xf32>
      %cst_39 = arith.constant dense<0.000000e+00> : vector<8x32xf32>
      %83 = tpu.matmul %81, %82, %cst_39 {dimension_numbers = #tpu.dot_dimension_numbers<[1], [0], [0], [1], [0, 0, 1, 1], [], []>} : vector<8x32xf32>, vector<32x32xf32>, vector<8x32xf32> -> vector<8x32xf32>
      %c0_40 = arith.constant 0 : index
      %c0_41 = arith.constant 0 : index
      %84 = vector.load %arg10[%c0_40, %c0_41] : memref<8x32xf32, #tpu.memory_space<vmem>>, vector<8x32xf32>
      tpu.vector_store %arg10[%c0_40, %c0_41], %83 {strides = array<i32>} : memref<8x32xf32, #tpu.memory_space<vmem>>, vector<8x32xf32>,
      %c0_42 = arith.constant 0 : index
      %c0_43 = arith.constant 0 : index
      %85 = vector.load %arg6[%c0_42, %c0_43] : memref<32x32xf32, #tpu.memory_space<vmem>>, vector<32x32xf32>
      %cst_44 = arith.constant dense<0.000000e+00> : vector<8x32xf32>
      %86 = tpu.matmul %81, %85, %cst_44 {dimension_numbers = #tpu.dot_dimension_numbers<[1], [0], [0], [1], [0, 0, 1, 1], [], []>} : vector<8x32xf32>, vector<32x32xf32>, vector<8x32xf32> -> vector<8x32xf32>
      %c0_45 = arith.constant 0 : index
      %c0_46 = arith.constant 0 : index
      %87 = vector.load %arg11[%c0_45, %c0_46] : memref<8x32xf32, #tpu.memory_space<vmem>>, vector<8x32xf32>
      tpu.vector_store %arg11[%c0_45, %c0_46], %86 {strides = array<i32>} : memref<8x32xf32, #tpu.memory_space<vmem>>, vector<8x32xf32>,
    } else {
    }
    %c0 = arith.constant 0 : index
    %c0_1 = arith.constant 0 : index
    %c0_2 = arith.constant 0 : index
    %3 = vector.load %arg2[%c0, %c0_1, %c0_2] : memref<1x16x32xf32, #tpu.memory_space<vmem>>, vector<1x16x32xf32>
    %4 = vector.shape_cast %3 : vector<1x16x32xf32> to vector<16x32xf32>
    %c0_3 = arith.constant 0 : index
    %c0_4 = arith.constant 0 : index
    %5 = vector.load %arg4[%c0_3, %c0_4] : memref<32x32xf32, #tpu.memory_space<vmem>>, vector<32x32xf32>
    %cst = arith.constant dense<0.000000e+00> : vector<16x32xf32>
    %6 = tpu.matmul %4, %5, %cst {dimension_numbers = #tpu.dot_dimension_numbers<[1], [0], [0], [1], [0, 0, 1, 1], [], []>} : vector<16x32xf32>, vector<32x32xf32>, vector<16x32xf32> -> vector<16x32xf32>
    %cst_5 = arith.constant 0.353553385 : f32
    %7 = vector.broadcast %cst_5 : f32 to vector<16x32xf32>
    %8 = arith.mulf %6, %7 : vector<16x32xf32>
    %c0_6 = arith.constant 0 : index
    %c0_7 = arith.constant 0 : index
    %9 = vector.load %arg10[%c0_6, %c0_7] : memref<8x32xf32, #tpu.memory_space<vmem>>, vector<8x32xf32>
    %c0_8 = arith.constant 0 : index
    %c0_9 = arith.constant 0 : index
    %10 = vector.load %arg11[%c0_8, %c0_9] : memref<8x32xf32, #tpu.memory_space<vmem>>, vector<8x32xf32>
    %11 = vector.extract_strided_slice %8 {offsets = [0, 0], sizes = [16, 8], strides = [1, 1]} : vector<16x32xf32> to vector<16x8xf32>
    %12 = vector.extract_strided_slice %9 {offsets = [0, 0], sizes = [8, 8], strides = [1, 1]} : vector<8x32xf32> to vector<8x8xf32>
    %13 = vector.extract_strided_slice %10 {offsets = [0, 0], sizes = [8, 8], strides = [1, 1]} : vector<8x32xf32> to vector<8x8xf32>
    %cst_10 = arith.constant dense<0.000000e+00> : vector<16x8xf32>
    %14 = tpu.matmul %11, %12, %cst_10 {dimension_numbers = #tpu.dot_dimension_numbers<[1], [1], [0], [0], [0, 0, 1, 0], [], []>} : vector<16x8xf32>, vector<8x8xf32>, vector<16x8xf32> -> vector<16x8xf32>
    %cst_11 = arith.constant dense<0xFF800000> : vector<16xf32>
    %15 = vector.multi_reduction <maximumf>, %14, %cst_11 [1] : vector<16x8xf32> to vector<16xf32>
    %16 = vector.shape_cast %15 : vector<16xf32> to vector<16x1xf32>
    %17 = vector.broadcast %16 : vector<16x1xf32> to vector<16x8xf32>
    %18 = arith.subf %14, %17 : vector<16x8xf32>
    %19 = math.exp %18 : vector<16x8xf32>
    %cst_12 = arith.constant dense<0.000000e+00> : vector<16xf32>
    %20 = vector.multi_reduction <add>, %19, %cst_12 [1] : vector<16x8xf32> to vector<16xf32>
    %21 = vector.shape_cast %20 : vector<16xf32> to vector<16x1xf32>
    %cst_13 = arith.constant dense<0.000000e+00> : vector<16x8xf32>
    %22 = tpu.matmul %19, %13, %cst_13 {dimension_numbers = #tpu.dot_dimension_numbers<[1], [0], [0], [1], [0, 0, 1, 1], [], []>} : vector<16x8xf32>, vector<8x8xf32>, vector<16x8xf32> -> vector<16x8xf32>
    %23 = tpu.reciprocal %21 {approx = true} : vector<16x1xf32> -> vector<16x1xf32>
    %24 = vector.broadcast %23 : vector<16x1xf32> to vector<16x8xf32>
    %25 = arith.mulf %22, %24 : vector<16x8xf32>
    %26 = vector.extract_strided_slice %8 {offsets = [0, 8], sizes = [16, 8], strides = [1, 1]} : vector<16x32xf32> to vector<16x8xf32>
    %27 = vector.extract_strided_slice %9 {offsets = [0, 8], sizes = [8, 8], strides = [1, 1]} : vector<8x32xf32> to vector<8x8xf32>
    %28 = vector.extract_strided_slice %10 {offsets = [0, 8], sizes = [8, 8], strides = [1, 1]} : vector<8x32xf32> to vector<8x8xf32>
    %cst_14 = arith.constant dense<0.000000e+00> : vector<16x8xf32>
    %29 = tpu.matmul %26, %27, %cst_14 {dimension_numbers = #tpu.dot_dimension_numbers<[1], [1], [0], [0], [0, 0, 1, 0], [], []>} : vector<16x8xf32>, vector<8x8xf32>, vector<16x8xf32> -> vector<16x8xf32>
    %cst_15 = arith.constant dense<0xFF800000> : vector<16xf32>
    %30 = vector.multi_reduction <maximumf>, %29, %cst_15 [1] : vector<16x8xf32> to vector<16xf32>
    %31 = vector.shape_cast %30 : vector<16xf32> to vector<16x1xf32>
    %32 = vector.broadcast %31 : vector<16x1xf32> to vector<16x8xf32>
    %33 = arith.subf %29, %32 : vector<16x8xf32>
    %34 = math.exp %33 : vector<16x8xf32>
    %cst_16 = arith.constant dense<0.000000e+00> : vector<16xf32>
    %35 = vector.multi_reduction <add>, %34, %cst_16 [1] : vector<16x8xf32> to vector<16xf32>
    %36 = vector.shape_cast %35 : vector<16xf32> to vector<16x1xf32>
    %cst_17 = arith.constant dense<0.000000e+00> : vector<16x8xf32>
    %37 = tpu.matmul %34, %28, %cst_17 {dimension_numbers = #tpu.dot_dimension_numbers<[1], [0], [0], [1], [0, 0, 1, 1], [], []>} : vector<16x8xf32>, vector<8x8xf32>, vector<16x8xf32> -> vector<16x8xf32>
    %38 = tpu.reciprocal %36 {approx = true} : vector<16x1xf32> -> vector<16x1xf32>
    %39 = vector.broadcast %38 : vector<16x1xf32> to vector<16x8xf32>
    %40 = arith.mulf %37, %39 : vector<16x8xf32>
    %41 = vector.extract_strided_slice %8 {offsets = [0, 16], sizes = [16, 8], strides = [1, 1]} : vector<16x32xf32> to vector<16x8xf32>
    %42 = vector.extract_strided_slice %9 {offsets = [0, 16], sizes = [8, 8], strides = [1, 1]} : vector<8x32xf32> to vector<8x8xf32>
    %43 = vector.extract_strided_slice %10 {offsets = [0, 16], sizes = [8, 8], strides = [1, 1]} : vector<8x32xf32> to vector<8x8xf32>
    %cst_18 = arith.constant dense<0.000000e+00> : vector<16x8xf32>
    %44 = tpu.matmul %41, %42, %cst_18 {dimension_numbers = #tpu.dot_dimension_numbers<[1], [1], [0], [0], [0, 0, 1, 0], [], []>} : vector<16x8xf32>, vector<8x8xf32>, vector<16x8xf32> -> vector<16x8xf32>
    %cst_19 = arith.constant dense<0xFF800000> : vector<16xf32>
    %45 = vector.multi_reduction <maximumf>, %44, %cst_19 [1] : vector<16x8xf32> to vector<16xf32>
    %46 = vector.shape_cast %45 : vector<16xf32> to vector<16x1xf32>
    %47 = vector.broadcast %46 : vector<16x1xf32> to vector<16x8xf32>
    %48 = arith.subf %44, %47 : vector<16x8xf32>
    %49 = math.exp %48 : vector<16x8xf32>
    %cst_20 = arith.constant dense<0.000000e+00> : vector<16xf32>
    %50 = vector.multi_reduction <add>, %49, %cst_20 [1] : vector<16x8xf32> to vector<16xf32>
    %51 = vector.shape_cast %50 : vector<16xf32> to vector<16x1xf32>
    %cst_21 = arith.constant dense<0.000000e+00> : vector<16x8xf32>
    %52 = tpu.matmul %49, %43, %cst_21 {dimension_numbers = #tpu.dot_dimension_numbers<[1], [0], [0], [1], [0, 0, 1, 1], [], []>} : vector<16x8xf32>, vector<8x8xf32>, vector<16x8xf32> -> vector<16x8xf32>
    %53 = tpu.reciprocal %51 {approx = true} : vector<16x1xf32> -> vector<16x1xf32>
    %54 = vector.broadcast %53 : vector<16x1xf32> to vector<16x8xf32>
    %55 = arith.mulf %52, %54 : vector<16x8xf32>
    %56 = vector.extract_strided_slice %8 {offsets = [0, 24], sizes = [16, 8], strides = [1, 1]} : vector<16x32xf32> to vector<16x8xf32>
    %57 = vector.extract_strided_slice %9 {offsets = [0, 24], sizes = [8, 8], strides = [1, 1]} : vector<8x32xf32> to vector<8x8xf32>
    %58 = vector.extract_strided_slice %10 {offsets = [0, 24], sizes = [8, 8], strides = [1, 1]} : vector<8x32xf32> to vector<8x8xf32>
    %cst_22 = arith.constant dense<0.000000e+00> : vector<16x8xf32>
    %59 = tpu.matmul %56, %57, %cst_22 {dimension_numbers = #tpu.dot_dimension_numbers<[1], [1], [0], [0], [0, 0, 1, 0], [], []>} : vector<16x8xf32>, vector<8x8xf32>, vector<16x8xf32> -> vector<16x8xf32>
    %cst_23 = arith.constant dense<0xFF800000> : vector<16xf32>
    %60 = vector.multi_reduction <maximumf>, %59, %cst_23 [1] : vector<16x8xf32> to vector<16xf32>
    %61 = vector.shape_cast %60 : vector<16xf32> to vector<16x1xf32>
    %62 = vector.broadcast %61 : vector<16x1xf32> to vector<16x8xf32>
    %63 = arith.subf %59, %62 : vector<16x8xf32>
    %64 = math.exp %63 : vector<16x8xf32>
    %cst_24 = arith.constant dense<0.000000e+00> : vector<16xf32>
    %65 = vector.multi_reduction <add>, %64, %cst_24 [1] : vector<16x8xf32> to vector<16xf32>
    %66 = vector.shape_cast %65 : vector<16xf32> to vector<16x1xf32>
    %cst_25 = arith.constant dense<0.000000e+00> : vector<16x8xf32>
    %67 = tpu.matmul %64, %58, %cst_25 {dimension_numbers = #tpu.dot_dimension_numbers<[1], [0], [0], [1], [0, 0, 1, 1], [], []>} : vector<16x8xf32>, vector<8x8xf32>, vector<16x8xf32> -> vector<16x8xf32>
    %68 = tpu.reciprocal %66 {approx = true} : vector<16x1xf32> -> vector<16x1xf32>
    %69 = vector.broadcast %68 : vector<16x1xf32> to vector<16x8xf32>
    %70 = arith.mulf %67, %69 : vector<16x8xf32>
    %71 = tpu.concatenate %25, %40, %55, %70 in 1 : vector<16x8xf32>, vector<16x8xf32>, vector<16x8xf32>, vector<16x8xf32> -> vector<16x32xf32>
    %c0_26 = arith.constant 0 : index
    %c0_27 = arith.constant 0 : index
    %72 = vector.load %arg7[%c0_26, %c0_27] : memref<32x32xf32, #tpu.memory_space<vmem>>, vector<32x32xf32>
    %cst_28 = arith.constant dense<0.000000e+00> : vector<16x32xf32>
    %73 = tpu.matmul %71, %72, %cst_28 {dimension_numbers = #tpu.dot_dimension_numbers<[1], [0], [0], [1], [0, 0, 1, 1], [], []>} : vector<16x32xf32>, vector<32x32xf32>, vector<16x32xf32> -> vector<16x32xf32>
    %c0_29 = arith.constant 0 : index
    %c0_30 = arith.constant 0 : index
    %74 = vector.load %arg8[%c0_29, %c0_30] : memref<1x32xf32, #tpu.memory_space<vmem>>, vector<1x32xf32>
    %75 = vector.broadcast %74 : vector<1x32xf32> to vector<16x32xf32>
    %76 = arith.addf %73, %75 : vector<16x32xf32>
    %c0_31 = arith.constant 0 : index
    %c0_32 = arith.constant 0 : index
    %c0_33 = arith.constant 0 : index
    %77 = vector.load %arg9[%c0_31, %c0_32, %c0_33] : memref<1x16x32xf32, #tpu.memory_space<vmem>>, vector<1x16x32xf32>
    %78 = vector.shape_cast %77 : vector<1x16x32xf32> to vector<16x32xf32>
    %79 = vector.shape_cast %76 : vector<16x32xf32> to vector<1x16x32xf32>
    tpu.vector_store %arg9[%c0_31, %c0_32, %c0_33], %79 {strides = array<i32>} : memref<1x16x32xf32, #tpu.memory_space<vmem>>, vector<1x16x32xf32>,
    return
  }
  func.func @transform_0(%arg0: i32, %arg1: i32) -> (i32, i32, i32) {
    %c0_i32 = arith.constant 0 : i32
    %c0_i32_0 = arith.constant 0 : i32
    return %arg0, %arg1, %c0_i32 : i32, i32, i32
  }
  func.func @transform_1(%arg0: i32, %arg1: i32) -> (i32, i32, i32) {
    %c0_i32 = arith.constant 0 : i32
    %c0_i32_0 = arith.constant 0 : i32
    %c0_i32_1 = arith.constant 0 : i32
    return %arg0, %c0_i32, %c0_i32_0 : i32, i32, i32
  }
  func.func @transform_2(%arg0: i32, %arg1: i32) -> (i32, i32) {
    %c0_i32 = arith.constant 0 : i32
    %c0_i32_0 = arith.constant 0 : i32
    %c0_i32_1 = arith.constant 0 : i32
    return %c0_i32, %c0_i32_0 : i32, i32
  }
  func.func @transform_3(%arg0: i32, %arg1: i32) -> (i32, i32) {
    %c0_i32 = arith.constant 0 : i32
    %c0_i32_0 = arith.constant 0 : i32
    %c0_i32_1 = arith.constant 0 : i32
    return %c0_i32, %c0_i32_0 : i32, i32
  }
  func.func @transform_4(%arg0: i32, %arg1: i32) -> (i32, i32) {
    %c0_i32 = arith.constant 0 : i32
    %c0_i32_0 = arith.constant 0 : i32
    %c0_i32_1 = arith.constant 0 : i32
    return %c0_i32, %c0_i32_0 : i32, i32
  }
  func.func @transform_5(%arg0: i32, %arg1: i32) -> (i32, i32) {
    %c0_i32 = arith.constant 0 : i32
    %c0_i32_0 = arith.constant 0 : i32
    %c0_i32_1 = arith.constant 0 : i32
    return %c0_i32, %c0_i32_0 : i32, i32
  }
  func.func @transform_6(%arg0: i32, %arg1: i32) -> (i32, i32) {
    %c0_i32 = arith.constant 0 : i32
    %c0_i32_0 = arith.constant 0 : i32
    %c0_i32_1 = arith.constant 0 : i32
    return %c0_i32, %c0_i32_0 : i32, i32
  }
  func.func @transform_7(%arg0: i32, %arg1: i32) -> (i32, i32, i32) {
    %c0_i32 = arith.constant 0 : i32
    %c0_i32_0 = arith.constant 0 : i32
    return %arg0, %arg1, %c0_i32 : i32, i32, i32
  }
}

module attributes {stable_mosaic.version = 11 : i64} {
  func.func @cross_attention_kernel(%arg0: i32, %arg1: i32, %arg2: memref<1x16x32xf32, #tpu.memory_space<vmem>>, %arg3: memref<1x8x32xf32, #tpu.memory_space<vmem>>, %arg4: memref<32x32xf32, #tpu.memory_space<vmem>>, %arg5: memref<32x32xf32, #tpu.memory_space<vmem>>, %arg6: memref<32x32xf32, #tpu.memory_space<vmem>>, %arg7: memref<32x32xf32, #tpu.memory_space<vmem>>, %arg8: memref<1x32xf32, #tpu.memory_space<vmem>>, %arg9: memref<1x16x32xf32, #tpu.memory_space<vmem>>, %arg10: memref<8x32xf32, #tpu.memory_space<vmem>>, %arg11: memref<8x32xf32, #tpu.memory_space<vmem>>) attributes {dimension_semantics = [#tpu.dimension_semantics<parallel>, #tpu.dimension_semantics<arbitrary>], iteration_bounds = array<i64: 2, 1>, scalar_prefetch = 0 : i64, scratch_operands = 2 : i64, tpu.core_type = #tpu.core_type<tc>, window_params = [{transform_indices = @transform_0, window_bounds = array<i64: 1, 16, 32>}, {transform_indices = @transform_1, window_bounds = array<i64: 1, 8, 32>}, {pipeline_mode = #tpu.pipeline_mode<synchronous>, transform_indices = @transform_2, window_bounds = array<i64: 32, 32>}, {pipeline_mode = #tpu.pipeline_mode<synchronous>, transform_indices = @transform_3, window_bounds = array<i64: 32, 32>}, {pipeline_mode = #tpu.pipeline_mode<synchronous>, transform_indices = @transform_4, window_bounds = array<i64: 32, 32>}, {pipeline_mode = #tpu.pipeline_mode<synchronous>, transform_indices = @transform_5, window_bounds = array<i64: 32, 32>}, {pipeline_mode = #tpu.pipeline_mode<synchronous>, transform_indices = @transform_6, window_bounds = array<i64: 1, 32>}, {transform_indices = @transform_7, window_bounds = array<i64: 1, 16, 32>}]} {
    %c0_i32 = arith.constant 0 : i32
    %0 = arith.cmpi eq, %arg1, %c0_i32 : i32
    %1 = arith.extui %0 : i1 to i32
    %c0_i32_0 = arith.constant 0 : i32
    %2 = arith.cmpi ne, %1, %c0_i32_0 : i32
    scf.if %2 {
      %c0_34 = arith.constant 0 : index
      %c0_35 = arith.constant 0 : index
      %c0_36 = arith.constant 0 : index
      %80 = vector.load %arg3[%c0_34, %c0_35, %c0_36] : memref<1x8x32xf32, #tpu.memory_space<vmem>>, vector<1x8x32xf32>
      %81 = vector.shape_cast %80 : vector<1x8x32xf32> to vector<8x32xf32>
      %c0_37 = arith.constant 0 : index
      %c0_38 = arith.constant 0 : index
      %82 = vector.load %arg5[%c0_37, %c0_38] : memref<32x32xf32, #tpu.memory_space<vmem>>, vector<32x32xf32>
      %cst_39 = arith.constant dense<0.000000e+00> : vector<8x32xf32>
      %83 = tpu.matmul %81, %82, %cst_39 {dimension_numbers = #tpu.dot_dimension_numbers<[1], [0], [0], [1], [0, 0, 1, 1], [], []>} : vector<8x32xf32>, vector<32x32xf32>, vector<8x32xf32> -> vector<8x32xf32>
      %c0_40 = arith.constant 0 : index
      %c0_41 = arith.constant 0 : index
      %84 = vector.load %arg10[%c0_40, %c0_41] : memref<8x32xf32, #tpu.memory_space<vmem>>, vector<8x32xf32>
      tpu.vector_store %arg10[%c0_40, %c0_41], %83 {strides = array<i32>} : memref<8x32xf32, #tpu.memory_space<vmem>>, vector<8x32xf32>,
      %c0_42 = arith.constant 0 : index
      %c0_43 = arith.constant 0 : index
      %85 = vector.load %arg6[%c0_42, %c0_43] : memref<32x32xf32, #tpu.memory_space<vmem>>, vector<32x32xf32>
      %cst_44 = arith.constant dense<0.000000e+00> : vector<8x32xf32>
      %86 = tpu.matmul %81, %85, %cst_44 {dimension_numbers = #tpu.dot_dimension_numbers<[1], [0], [0], [1], [0, 0, 1, 1], [], []>} : vector<8x32xf32>, vector<32x32xf32>, vector<8x32xf32> -> vector<8x32xf32>
      %c0_45 = arith.constant 0 : index
      %c0_46 = arith.constant 0 : index
      %87 = vector.load %arg11[%c0_45, %c0_46] : memref<8x32xf32, #tpu.memory_space<vmem>>, vector<8x32xf32>
      tpu.vector_store %arg11[%c0_45, %c0_46], %86 {strides = array<i32>} : memref<8x32xf32, #tpu.memory_space<vmem>>, vector<8x32xf32>,
    } else {
    }
    %c0 = arith.constant 0 : index
    %c0_1 = arith.constant 0 : index
    %c0_2 = arith.constant 0 : index
    %3 = vector.load %arg2[%c0, %c0_1, %c0_2] : memref<1x16x32xf32, #tpu.memory_space<vmem>>, vector<1x16x32xf32>
    %4 = vector.shape_cast %3 : vector<1x16x32xf32> to vector<16x32xf32>
    %c0_3 = arith.constant 0 : index
    %c0_4 = arith.constant 0 : index
    %5 = vector.load %arg4[%c0_3, %c0_4] : memref<32x32xf32, #tpu.memory_space<vmem>>, vector<32x32xf32>
    %cst = arith.constant dense<0.000000e+00> : vector<16x32xf32>
    %6 = tpu.matmul %4, %5, %cst {dimension_numbers = #tpu.dot_dimension_numbers<[1], [0], [0], [1], [0, 0, 1, 1], [], []>} : vector<16x32xf32>, vector<32x32xf32>, vector<16x32xf32> -> vector<16x32xf32>
    %cst_5 = arith.constant 0.353553385 : f32
    %7 = vector.broadcast %cst_5 : f32 to vector<16x32xf32>
    %8 = arith.mulf %6, %7 : vector<16x32xf32>
    %c0_6 = arith.constant 0 : index
    %c0_7 = arith.constant 0 : index
    %9 = vector.load %arg10[%c0_6, %c0_7] : memref<8x32xf32, #tpu.memory_space<vmem>>, vector<8x32xf32>
    %c0_8 = arith.constant 0 : index
    %c0_9 = arith.constant 0 : index
    %10 = vector.load %arg11[%c0_8, %c0_9] : memref<8x32xf32, #tpu.memory_space<vmem>>, vector<8x32xf32>
    %11 = vector.extract_strided_slice %8 {offsets = [0, 0], sizes = [16, 8], strides = [1, 1]} : vector<16x32xf32> to vector<16x8xf32>
    %12 = vector.extract_strided_slice %9 {offsets = [0, 0], sizes = [8, 8], strides = [1, 1]} : vector<8x32xf32> to vector<8x8xf32>
    %13 = vector.extract_strided_slice %10 {offsets = [0, 0], sizes = [8, 8], strides = [1, 1]} : vector<8x32xf32> to vector<8x8xf32>
    %cst_10 = arith.constant dense<0.000000e+00> : vector<16x8xf32>
    %14 = tpu.matmul %11, %12, %cst_10 {dimension_numbers = #tpu.dot_dimension_numbers<[1], [1], [0], [0], [0, 0, 1, 0], [], []>} : vector<16x8xf32>, vector<8x8xf32>, vector<16x8xf32> -> vector<16x8xf32>
    %cst_11 = arith.constant dense<0xFF800000> : vector<16xf32>
    %15 = vector.multi_reduction <maximumf>, %14, %cst_11 [1] : vector<16x8xf32> to vector<16xf32>
    %16 = vector.shape_cast %15 : vector<16xf32> to vector<16x1xf32>
    %17 = vector.broadcast %16 : vector<16x1xf32> to vector<16x8xf32>
    %18 = arith.subf %14, %17 : vector<16x8xf32>
    %19 = math.exp %18 : vector<16x8xf32>
    %cst_12 = arith.constant dense<0.000000e+00> : vector<16xf32>
    %20 = vector.multi_reduction <add>, %19, %cst_12 [1] : vector<16x8xf32> to vector<16xf32>
    %21 = vector.shape_cast %20 : vector<16xf32> to vector<16x1xf32>
    %cst_13 = arith.constant dense<0.000000e+00> : vector<16x8xf32>
    %22 = tpu.matmul %19, %13, %cst_13 {dimension_numbers = #tpu.dot_dimension_numbers<[1], [0], [0], [1], [0, 0, 1, 1], [], []>} : vector<16x8xf32>, vector<8x8xf32>, vector<16x8xf32> -> vector<16x8xf32>
    %23 = tpu.reciprocal %21 {approx = true} : vector<16x1xf32> -> vector<16x1xf32>
    %24 = vector.broadcast %23 : vector<16x1xf32> to vector<16x8xf32>
    %25 = arith.mulf %22, %24 : vector<16x8xf32>
    %26 = vector.extract_strided_slice %8 {offsets = [0, 8], sizes = [16, 8], strides = [1, 1]} : vector<16x32xf32> to vector<16x8xf32>
    %27 = vector.extract_strided_slice %9 {offsets = [0, 8], sizes = [8, 8], strides = [1, 1]} : vector<8x32xf32> to vector<8x8xf32>
    %28 = vector.extract_strided_slice %10 {offsets = [0, 8], sizes = [8, 8], strides = [1, 1]} : vector<8x32xf32> to vector<8x8xf32>
    %cst_14 = arith.constant dense<0.000000e+00> : vector<16x8xf32>
    %29 = tpu.matmul %26, %27, %cst_14 {dimension_numbers = #tpu.dot_dimension_numbers<[1], [1], [0], [0], [0, 0, 1, 0], [], []>} : vector<16x8xf32>, vector<8x8xf32>, vector<16x8xf32> -> vector<16x8xf32>
    %cst_15 = arith.constant dense<0xFF800000> : vector<16xf32>
    %30 = vector.multi_reduction <maximumf>, %29, %cst_15 [1] : vector<16x8xf32> to vector<16xf32>
    %31 = vector.shape_cast %30 : vector<16xf32> to vector<16x1xf32>
    %32 = vector.broadcast %31 : vector<16x1xf32> to vector<16x8xf32>
    %33 = arith.subf %29, %32 : vector<16x8xf32>
    %34 = math.exp %33 : vector<16x8xf32>
    %cst_16 = arith.constant dense<0.000000e+00> : vector<16xf32>
    %35 = vector.multi_reduction <add>, %34, %cst_16 [1] : vector<16x8xf32> to vector<16xf32>
    %36 = vector.shape_cast %35 : vector<16xf32> to vector<16x1xf32>
    %cst_17 = arith.constant dense<0.000000e+00> : vector<16x8xf32>
    %37 = tpu.matmul %34, %28, %cst_17 {dimension_numbers = #tpu.dot_dimension_numbers<[1], [0], [0], [1], [0, 0, 1, 1], [], []>} : vector<16x8xf32>, vector<8x8xf32>, vector<16x8xf32> -> vector<16x8xf32>
    %38 = tpu.reciprocal %36 {approx = true} : vector<16x1xf32> -> vector<16x1xf32>
    %39 = vector.broadcast %38 : vector<16x1xf32> to vector<16x8xf32>
    %40 = arith.mulf %37, %39 : vector<16x8xf32>
    %41 = vector.extract_strided_slice %8 {offsets = [0, 16], sizes = [16, 8], strides = [1, 1]} : vector<16x32xf32> to vector<16x8xf32>
    %42 = vector.extract_strided_slice %9 {offsets = [0, 16], sizes = [8, 8], strides = [1, 1]} : vector<8x32xf32> to vector<8x8xf32>
    %43 = vector.extract_strided_slice %10 {offsets = [0, 16], sizes = [8, 8], strides = [1, 1]} : vector<8x32xf32> to vector<8x8xf32>
    %cst_18 = arith.constant dense<0.000000e+00> : vector<16x8xf32>
    %44 = tpu.matmul %41, %42, %cst_18 {dimension_numbers = #tpu.dot_dimension_numbers<[1], [1], [0], [0], [0, 0, 1, 0], [], []>} : vector<16x8xf32>, vector<8x8xf32>, vector<16x8xf32> -> vector<16x8xf32>
    %cst_19 = arith.constant dense<0xFF800000> : vector<16xf32>
    %45 = vector.multi_reduction <maximumf>, %44, %cst_19 [1] : vector<16x8xf32> to vector<16xf32>
    %46 = vector.shape_cast %45 : vector<16xf32> to vector<16x1xf32>
    %47 = vector.broadcast %46 : vector<16x1xf32> to vector<16x8xf32>
    %48 = arith.subf %44, %47 : vector<16x8xf32>
    %49 = math.exp %48 : vector<16x8xf32>
    %cst_20 = arith.constant dense<0.000000e+00> : vector<16xf32>
    %50 = vector.multi_reduction <add>, %49, %cst_20 [1] : vector<16x8xf32> to vector<16xf32>
    %51 = vector.shape_cast %50 : vector<16xf32> to vector<16x1xf32>
    %cst_21 = arith.constant dense<0.000000e+00> : vector<16x8xf32>
    %52 = tpu.matmul %49, %43, %cst_21 {dimension_numbers = #tpu.dot_dimension_numbers<[1], [0], [0], [1], [0, 0, 1, 1], [], []>} : vector<16x8xf32>, vector<8x8xf32>, vector<16x8xf32> -> vector<16x8xf32>
    %53 = tpu.reciprocal %51 {approx = true} : vector<16x1xf32> -> vector<16x1xf32>
    %54 = vector.broadcast %53 : vector<16x1xf32> to vector<16x8xf32>
    %55 = arith.mulf %52, %54 : vector<16x8xf32>
    %56 = vector.extract_strided_slice %8 {offsets = [0, 24], sizes = [16, 8], strides = [1, 1]} : vector<16x32xf32> to vector<16x8xf32>
    %57 = vector.extract_strided_slice %9 {offsets = [0, 24], sizes = [8, 8], strides = [1, 1]} : vector<8x32xf32> to vector<8x8xf32>
    %58 = vector.extract_strided_slice %10 {offsets = [0, 24], sizes = [8, 8], strides = [1, 1]} : vector<8x32xf32> to vector<8x8xf32>
    %cst_22 = arith.constant dense<0.000000e+00> : vector<16x8xf32>
    %59 = tpu.matmul %56, %57, %cst_22 {dimension_numbers = #tpu.dot_dimension_numbers<[1], [1], [0], [0], [0, 0, 1, 0], [], []>} : vector<16x8xf32>, vector<8x8xf32>, vector<16x8xf32> -> vector<16x8xf32>
    %cst_23 = arith.constant dense<0xFF800000> : vector<16xf32>
    %60 = vector.multi_reduction <maximumf>, %59, %cst_23 [1] : vector<16x8xf32> to vector<16xf32>
    %61 = vector.shape_cast %60 : vector<16xf32> to vector<16x1xf32>
    %62 = vector.broadcast %61 : vector<16x1xf32> to vector<16x8xf32>
    %63 = arith.subf %59, %62 : vector<16x8xf32>
    %64 = math.exp %63 : vector<16x8xf32>
    %cst_24 = arith.constant dense<0.000000e+00> : vector<16xf32>
    %65 = vector.multi_reduction <add>, %64, %cst_24 [1] : vector<16x8xf32> to vector<16xf32>
    %66 = vector.shape_cast %65 : vector<16xf32> to vector<16x1xf32>
    %cst_25 = arith.constant dense<0.000000e+00> : vector<16x8xf32>
    %67 = tpu.matmul %64, %58, %cst_25 {dimension_numbers = #tpu.dot_dimension_numbers<[1], [0], [0], [1], [0, 0, 1, 1], [], []>} : vector<16x8xf32>, vector<8x8xf32>, vector<16x8xf32> -> vector<16x8xf32>
    %68 = tpu.reciprocal %66 {approx = true} : vector<16x1xf32> -> vector<16x1xf32>
    %69 = vector.broadcast %68 : vector<16x1xf32> to vector<16x8xf32>
    %70 = arith.mulf %67, %69 : vector<16x8xf32>
    %71 = tpu.concatenate %25, %40, %55, %70 in 1 : vector<16x8xf32>, vector<16x8xf32>, vector<16x8xf32>, vector<16x8xf32> -> vector<16x32xf32>
    %c0_26 = arith.constant 0 : index
    %c0_27 = arith.constant 0 : index
    %72 = vector.load %arg7[%c0_26, %c0_27] : memref<32x32xf32, #tpu.memory_space<vmem>>, vector<32x32xf32>
    %cst_28 = arith.constant dense<0.000000e+00> : vector<16x32xf32>
    %73 = tpu.matmul %71, %72, %cst_28 {dimension_numbers = #tpu.dot_dimension_numbers<[1], [0], [0], [1], [0, 0, 1, 1], [], []>} : vector<16x32xf32>, vector<32x32xf32>, vector<16x32xf32> -> vector<16x32xf32>
    %c0_29 = arith.constant 0 : index
    %c0_30 = arith.constant 0 : index
    %74 = vector.load %arg8[%c0_29, %c0_30] : memref<1x32xf32, #tpu.memory_space<vmem>>, vector<1x32xf32>
    %75 = vector.broadcast %74 : vector<1x32xf32> to vector<16x32xf32>
    %76 = arith.addf %73, %75 : vector<16x32xf32>
    %c0_31 = arith.constant 0 : index
    %c0_32 = arith.constant 0 : index
    %c0_33 = arith.constant 0 : index
    %77 = vector.load %arg9[%c0_31, %c0_32, %c0_33] : memref<1x16x32xf32, #tpu.memory_space<vmem>>, vector<1x16x32xf32>
    %78 = vector.shape_cast %77 : vector<1x16x32xf32> to vector<16x32xf32>
    %79 = vector.shape_cast %76 : vector<16x32xf32> to vector<1x16x32xf32>
    tpu.vector_store %arg9[%c0_31, %c0_32, %c0_33], %79 {strides = array<i32>} : memref<1x16x32xf32, #tpu.memory_space<vmem>>, vector<1x16x32xf32>,
    return
  }
  func.func @transform_0(%arg0: i32, %arg1: i32) -> (i32, i32, i32) {
    %c0_i32 = arith.constant 0 : i32
    %c0_i32_0 = arith.constant 0 : i32
    return %arg0, %arg1, %c0_i32 : i32, i32, i32
  }
  func.func @transform_1(%arg0: i32, %arg1: i32) -> (i32, i32, i32) {
    %c0_i32 = arith.constant 0 : i32
    %c0_i32_0 = arith.constant 0 : i32
    %c0_i32_1 = arith.constant 0 : i32
    return %arg0, %c0_i32, %c0_i32_0 : i32, i32, i32
  }
  func.func @transform_2(%arg0: i32, %arg1: i32) -> (i32, i32) {
    %c0_i32 = arith.constant 0 : i32
    %c0_i32_0 = arith.constant 0 : i32
    %c0_i32_1 = arith.constant 0 : i32
    return %c0_i32, %c0_i32_0 : i32, i32
  }
  func.func @transform_3(%arg0: i32, %arg1: i32) -> (i32, i32) {
    %c0_i32 = arith.constant 0 : i32
    %c0_i32_0 = arith.constant 0 : i32
    %c0_i32_1 = arith.constant 0 : i32
    return %c0_i32, %c0_i32_0 : i32, i32
  }
  func.func @transform_4(%arg0: i32, %arg1: i32) -> (i32, i32) {
    %c0_i32 = arith.constant 0 : i32
    %c0_i32_0 = arith.constant 0 : i32
    %c0_i32_1 = arith.constant 0 : i32
    return %c0_i32, %c0_i32_0 : i32, i32
  }
  func.func @transform_5(%arg0: i32, %arg1: i32) -> (i32, i32) {
    %c0_i32 = arith.constant 0 : i32
    %c0_i32_0 = arith.constant 0 : i32
    %c0_i32_1 = arith.constant 0 : i32
    return %c0_i32, %c0_i32_0 : i32, i32
  }
  func.func @transform_6(%arg0: i32, %arg1: i32) -> (i32, i32) {
    %c0_i32 = arith.constant 0 : i32
    %c0_i32_0 = arith.constant 0 : i32
    %c0_i32_1 = arith.constant 0 : i32
    return %c0_i32, %c0_i32_0 : i32, i32
  }
  func.func @transform_7(%arg0: i32, %arg1: i32) -> (i32, i32, i32) {
    %c0_i32 = arith.constant 0 : i32
    %c0_i32_0 = arith.constant 0 : i32
    return %arg0, %arg1, %c0_i32 : i32, i32, i32
  }
}

</mosaic_0001>

<llo_original>
// kernel: tpu_custom_call.1
$region0: #{tpu_custom_call.1}
  #allocation0 [shape = 'u32[]', space=smem, size = 0x4, offset = 0x4, fixed_abs, tag = 'smem constant byte address 0x4 - core index']
  #allocation1 [shape = 'u32[72,128]{1,0:T(1,128)}', space=vmem, size = 0x9000, scoped, tag = 'internal scratch']
  #allocation2 [shape = 'f32[8,32]{1,0:T(8,128)}', space=vmem, size = 0x1000, scoped, tag = 'scratch operand']
  #allocation3 [shape = 'f32[8,32]{1,0:T(8,128)}', space=vmem, size = 0x1000, scoped, tag = 'scratch operand']
  %s0 = inlined_call_operand.hbm [shape: f32[2,16,32], index: 0, kind: input, shape index: {}]
  %s1 = inlined_call_operand.hbm [shape: f32[2,8,32], index: 1, kind: input, shape index: {}]
  %s2 = inlined_call_operand.hbm [shape: f32[32,32], index: 2, kind: input, shape index: {}]
  %s3 = inlined_call_operand.hbm [shape: f32[32,32], index: 3, kind: input, shape index: {}]
  %s4 = inlined_call_operand.hbm [shape: f32[32,32], index: 4, kind: input, shape index: {}]
  %s5 = inlined_call_operand.hbm [shape: f32[32,32], index: 5, kind: input, shape index: {}]
  %s6 = inlined_call_operand.vmem [shape: f32[1,32], index: 6, kind: input, shape index: {}]
  %s7 = inlined_call_operand.hbm [shape: f32[2,16,32], index: 7, kind: output, shape index: {}]
  %s8 = sld [smem:[#allocation0]]
  $region89: #{tpu_custom_call.1} parent=0
    _
  %s10 = ssub.s32 1, %s8
  %s11 = scalar_select 0, %s10, %s8
  $region1: #{tpu_custom_call.1} parent=0
    #allocation4 [shape = 'u8[16384]{0}', space=vmem, size = 0x4000, scoped, tag = 'input window, operand 0']
    #allocation5 [shape = 's32[2]{0}', space=sflag, size = 0x8, scoped, tag = 'scoped memory for tpu_custom_call.1']
    #allocation6 [shape = 's32[2]{0}', space=sflag, size = 0x8, scoped, tag = 'scoped memory for tpu_custom_call.1']
    #allocation7 [shape = 'u8[8192]{0}', space=vmem, size = 0x2000, scoped, tag = 'input window, operand 1']
    #allocation8 [shape = 's32[2]{0}', space=sflag, size = 0x8, scoped, tag = 'scoped memory for tpu_custom_call.1']
    #allocation9 [shape = 'u8[16384]{0}', space=vmem, size = 0x4000, scoped, tag = 'input window, operand 2, single buffered']
    #allocation10 [shape = 'u8[16384]{0}', space=vmem, size = 0x4000, scoped, tag = 'input window, operand 3, single buffered']
    #allocation11 [shape = 's32[1]{0}', space=sflag, size = 0x4, scoped, tag = 'scoped memory for tpu_custom_call.1']
    #allocation12 [shape = 'u8[16384]{0}', space=vmem, size = 0x4000, scoped, tag = 'input window, operand 4, single buffered']
    #allocation13 [shape = 'u8[16384]{0}', space=vmem, size = 0x4000, scoped, tag = 'input window, operand 5, single buffered']
    #allocation14 [shape = 's32[1]{0}', space=sflag, size = 0x4, scoped, tag = 'scoped memory for tpu_custom_call.1']
    #allocation15 [shape = 'u8[16384]{0}', space=vmem, size = 0x4000, scoped, tag = 'output window, operand 0']
    %12 = vsyncpa [#allocation5], 0
    %s13 = scalar_lea.sflag [#allocation5], 1
    %14 = vsyncpa %s13, 0
    %15 = vsyncpa [#allocation8], 0
    %s16 = scalar_lea.sflag [#allocation8], 1
    %17 = vsyncpa %s16, 0
    %18 = vsyncpa [#allocation11], 0
    %19 = vsyncpa [#allocation14], 0
    %20 = vsyncpa [#allocation6], 0
    %s21 = scalar_lea.sflag [#allocation6], 1
    %22 = vsyncpa %s21, 0
    loop: start=0, step=1, limit=4
    $region2: #{tpu_custom_call.1} parent=1 // loop_pre_header
      _
    $region3: #{tpu_custom_call.1} parent=1 // loop_header
      %s24 = sphi 0, %s28
      %p25 = scmp.ge.s32.totalorder %s24, 4
      %s31 = sphi 0, %s43
      %s32 = sphi 0, %s39
      %s33 = sphi 0, %s31
      %s34 = sphi 0, %s32
      %s35 = sphi 0, %s33
      %s36 = sphi 0, %s34
      %s48 = sphi 0, %s50
      %s51 = sphi 0, %s48
      %s52 = sphi 0, %s51
      %s68 = sphi 0, %s52
      %s74 = sphi 0, %s76
      %s77 = sphi 0, %s74
      %s78 = sphi 0, %s77
      %s94 = sphi 0, %s78
      %s98 = sphi 0, %s98
      %s100 = sphi 0, %s98
      %s101 = sphi 0, %s100
      %s115 = sphi 0, %s101
      %s119 = sphi 0, %s119
      %s121 = sphi 0, %s119
      %s122 = sphi 0, %s121
      %s136 = sphi 0, %s122
      %s140 = sphi 0, %s140
      %s142 = sphi 0, %s140
      %s143 = sphi 0, %s142
      %s157 = sphi 0, %s143
      %s161 = sphi 0, %s161
      %s163 = sphi 0, %s161
      %s164 = sphi 0, %s163
      %s178 = sphi 0, %s164
      %s182 = sphi 0, %s182
      %s184 = sphi 0, %s182
      %s185 = sphi 0, %s184
      %s199 = sphi 0, %s185
      %s207 = sphi 0, %s209
      %s210 = sphi 0, %s207
      %s211 = sphi 0, %s210
      %s227 = sphi 0, %s211
    $region4: #{tpu_custom_call.1} parent=1 // loop_header_branch
      %27 = sbr.rel (%p25) target = $region8
    $region5: #{tpu_custom_call.1} parent=1 // loop_body
      %s29 = ssub.s32 %s24, 1
      %s30 = ssub.s32 %s24, 2
      %s37 = sadd.s32 1, %s32
      %p38 = scmp.ge.s32.totalorder %s37, 1
      %s39 = scalar_select %p38, 0, %s37
      %s40 = sadd.s32 1, %s31
      %s41 = scalar_select %p38, %s40, %s31
      %p42 = scmp.ge.s32.totalorder %s41, 2
      %s43 = scalar_select %p42, 0, %s41
      %s44 = ssub.s32 %s31, %s43
      %s45 = ssub.s32 %s32, %s39
      %s46 = sor.u32 %s44, %s45
      %p47 = scmp.eq.s32.totalorder %s46, 0
      %s49 = sadd.s32 %s48, 1
      %s50 = scalar_select %p47, %s48, %s49
      %p53 = pneg %p47
      %p54 = scmp.eq.s32.totalorder %s24, 1
      %p55 = por %p53, %p54
      %p56 = scmp.ne.s32.totalorder %s48, %s51
      %p57 = scmp.eq.s32.totalorder %s24, 0
      %p58 = por %p56, %p57
      %p59 = scmp.ne.s32.totalorder %s48, %s51
      %p60 = scmp.eq.s32.totalorder %s29, 1
      %p61 = por %p59, %p60
      %p62 = scmp.ne.s32.totalorder %s51, %s52
      %p63 = scmp.eq.s32.totalorder %s29, 0
      %p64 = por %p62, %p63
      %p65 = scmp.ne.s32.totalorder %s51, %s52
      %p66 = scmp.eq.s32.totalorder %s30, 1
      %p67 = por %p65, %p66
      %p69 = scmp.ne.s32.totalorder %s52, %s68
      %p70 = scmp.eq.s32.totalorder %s30, 0
      %p71 = por %p69, %p70
      %s72 = ssub.s32 %s31, %s43
      %p73 = scmp.eq.s32.totalorder %s72, 0
      %s75 = sadd.s32 %s74, 1
      %s76 = scalar_select %p73, %s74, %s75
      %p79 = pneg %p73
      %p80 = scmp.eq.s32.totalorder %s24, 1
      %p81 = por %p79, %p80
      %p82 = scmp.ne.s32.totalorder %s74, %s77
      %p83 = scmp.eq.s32.totalorder %s24, 0
      %p84 = por %p82, %p83
      %p85 = scmp.ne.s32.totalorder %s74, %s77
      %p86 = scmp.eq.s32.totalorder %s29, 1
      %p87 = por %p85, %p86
      %p88 = scmp.ne.s32.totalorder %s77, %s78
      %p89 = scmp.eq.s32.totalorder %s29, 0
      %p90 = por %p88, %p89
      %p91 = scmp.ne.s32.totalorder %s77, %s78
      %p92 = scmp.eq.s32.totalorder %s30, 1
      %p93 = por %p91, %p92
      %p95 = scmp.ne.s32.totalorder %s78, %s94
      %p96 = scmp.eq.s32.totalorder %s30, 0
      %p97 = por %p95, %p96
      %s99 = sadd.s32 %s98, 1
      %p102 = scmp.eq.s32.totalorder %s24, 1
      %p103 = scmp.ne.s32.totalorder %s98, %s100
      %p104 = scmp.eq.s32.totalorder %s24, 0
      %p105 = por %p103, %p104
      %p106 = scmp.ne.s32.totalorder %s98, %s100
      %p107 = scmp.eq.s32.totalorder %s29, 1
      %p108 = por %p106, %p107
      %p109 = scmp.ne.s32.totalorder %s100, %s101
      %p110 = scmp.eq.s32.totalorder %s29, 0
      %p111 = por %p109, %p110
      %p112 = scmp.ne.s32.totalorder %s100, %s101
      %p113 = scmp.eq.s32.totalorder %s30, 1
      %p114 = por %p112, %p113
      %p116 = scmp.ne.s32.totalorder %s101, %s115
      %p117 = scmp.eq.s32.totalorder %s30, 0
      %p118 = por %p116, %p117
      %s120 = sadd.s32 %s119, 1
      %p123 = scmp.eq.s32.totalorder %s24, 1
      %p124 = scmp.ne.s32.totalorder %s119, %s121
      %p125 = scmp.eq.s32.totalorder %s24, 0
      %p126 = por %p124, %p125
      %p127 = scmp.ne.s32.totalorder %s119, %s121
      %p128 = scmp.eq.s32.totalorder %s29, 1
      %p129 = por %p127, %p128
      %p130 = scmp.ne.s32.totalorder %s121, %s122
      %p131 = scmp.eq.s32.totalorder %s29, 0
      %p132 = por %p130, %p131
      %p133 = scmp.ne.s32.totalorder %s121, %s122
      %p134 = scmp.eq.s32.totalorder %s30, 1
      %p135 = por %p133, %p134
      %p137 = scmp.ne.s32.totalorder %s122, %s136
      %p138 = scmp.eq.s32.totalorder %s30, 0
      %p139 = por %p137, %p138
      %s141 = sadd.s32 %s140, 1
      %p144 = scmp.eq.s32.totalorder %s24, 1
      %p145 = scmp.ne.s32.totalorder %s140, %s142
      %p146 = scmp.eq.s32.totalorder %s24, 0
      %p147 = por %p145, %p146
      %p148 = scmp.ne.s32.totalorder %s140, %s142
      %p149 = scmp.eq.s32.totalorder %s29, 1
      %p150 = por %p148, %p149
      %p151 = scmp.ne.s32.totalorder %s142, %s143
      %p152 = scmp.eq.s32.totalorder %s29, 0
      %p153 = por %p151, %p152
      %p154 = scmp.ne.s32.totalorder %s142, %s143
      %p155 = scmp.eq.s32.totalorder %s30, 1
      %p156 = por %p154, %p155
      %p158 = scmp.ne.s32.totalorder %s143, %s157
      %p159 = scmp.eq.s32.totalorder %s30, 0
      %p160 = por %p158, %p159
      %s162 = sadd.s32 %s161, 1
      %p165 = scmp.eq.s32.totalorder %s24, 1
      %p166 = scmp.ne.s32.totalorder %s161, %s163
      %p167 = scmp.eq.s32.totalorder %s24, 0
      %p168 = por %p166, %p167
      %p169 = scmp.ne.s32.totalorder %s161, %s163
      %p170 = scmp.eq.s32.totalorder %s29, 1
      %p171 = por %p169, %p170
      %p172 = scmp.ne.s32.totalorder %s163, %s164
      %p173 = scmp.eq.s32.totalorder %s29, 0
      %p174 = por %p172, %p173
      %p175 = scmp.ne.s32.totalorder %s163, %s164
      %p176 = scmp.eq.s32.totalorder %s30, 1
      %p177 = por %p175, %p176
      %p179 = scmp.ne.s32.totalorder %s164, %s178
      %p180 = scmp.eq.s32.totalorder %s30, 0
      %p181 = por %p179, %p180
      %s183 = sadd.s32 %s182, 1
      %p186 = scmp.eq.s32.totalorder %s24, 1
      %p187 = scmp.ne.s32.totalorder %s182, %s184
      %p188 = scmp.eq.s32.totalorder %s24, 0
      %p189 = por %p187, %p188
      %p190 = scmp.ne.s32.totalorder %s182, %s184
      %p191 = scmp.eq.s32.totalorder %s29, 1
      %p192 = por %p190, %p191
      %p193 = scmp.ne.s32.totalorder %s184, %s185
      %p194 = scmp.eq.s32.totalorder %s29, 0
      %p195 = por %p193, %p194
      %p196 = scmp.ne.s32.totalorder %s184, %s185
      %p197 = scmp.eq.s32.totalorder %s30, 1
      %p198 = por %p196, %p197
      %p200 = scmp.ne.s32.totalorder %s185, %s199
      %p201 = scmp.eq.s32.totalorder %s30, 0
      %p202 = por %p200, %p201
      %s203 = ssub.s32 %s31, %s43
      %s204 = ssub.s32 %s32, %s39
      %s205 = sor.u32 %s203, %s204
      %p206 = scmp.eq.s32.totalorder %s205, 0
      %s208 = sadd.s32 %s207, 1
      %s209 = scalar_select %p206, %s207, %s208
      %p212 = pneg %p206
      %p213 = scmp.eq.s32.totalorder %s24, 1
      %p214 = por %p212, %p213
      %p215 = scmp.ne.s32.totalorder %s207, %s210
      %p216 = scmp.eq.s32.totalorder %s24, 0
      %p217 = por %p215, %p216
      %p218 = scmp.ne.s32.totalorder %s207, %s210
      %p219 = scmp.eq.s32.totalorder %s29, 1
      %p220 = por %p218, %p219
      %p221 = scmp.ne.s32.totalorder %s210, %s211
      %p222 = scmp.eq.s32.totalorder %s29, 0
      %p223 = por %p221, %p222
      %p224 = scmp.ne.s32.totalorder %s210, %s211
      %p225 = scmp.eq.s32.totalorder %s30, 1
      %p226 = por %p224, %p225
      %p228 = scmp.ne.s32.totalorder %s211, %s227
      %p229 = scmp.eq.s32.totalorder %s30, 0
      %p230 = por %p228, %p229
      %p231 = scmp.le.s32.totalorder 1, %s24
      %p232 = scmp.lt.s32.totalorder %s24, 3
      %p233 = pnand %p231, %p232
      %p234 = pneg %p233
      // Predicated region
      $region9: #{tpu_custom_call.1} parent=5 // pred_check
        _
      $region10: #{tpu_custom_call.1} parent=5 // pred_check_branch
        %236 = sbr.rel (%p233) target = $region12
      $region11: #{tpu_custom_call.1} parent=5 // pred_region
        %s237 = ssub.s32 %s24, 1
        // Predicated region
        $region13: #{tpu_custom_call.1} parent=11 // pred_check
          %p238 = pneg %p111
        $region14: #{tpu_custom_call.1} parent=11 // pred_check_branch
          %240 = sbr.rel (%p238) target = $region16
        $region15: #{tpu_custom_call.1} parent=11 // pred_region
          %242 = vsyncadd [#allocation8], 0
          %s243 = sshll.u32 %s2, 4
          %s244 = int_to_ptr.hbm [resolvable:$true] %s243
          %s245 = sshll.u32 [#allocation9], 4
          %s246 = int_to_ptr.vmem [resolvable:$true] %s245
          %251 = dma.hbm_to_vmem [thread:$0]  %s244, 512, %s246, [#allocation8], 128, 128, 8
        $region16: #{tpu_custom_call.1} parent=11 // pred_fallthru
          _
        // Predicated region
        $region17: #{tpu_custom_call.1} parent=11 // pred_check
          %p252 = pneg %p132
        $region18: #{tpu_custom_call.1} parent=11 // pred_check_branch
          %254 = sbr.rel (%p252) target = $region20
        $region19: #{tpu_custom_call.1} parent=11 // pred_region
          %256 = vsyncadd [#allocation11], 0
          %s257 = sshll.u32 %s3, 4
          %s258 = int_to_ptr.hbm [resolvable:$true] %s257
          %s259 = sshll.u32 [#allocation10], 4
          %s260 = int_to_ptr.vmem [resolvable:$true] %s259
          %265 = dma.hbm_to_vmem [thread:$0]  %s258, 512, %s260, [#allocation11], 128, 128, 8
        $region20: #{tpu_custom_call.1} parent=11 // pred_fallthru
          _
        // Predicated region
        $region21: #{tpu_custom_call.1} parent=11 // pred_check
          %p266 = pneg %p153
        $region22: #{tpu_custom_call.1} parent=11 // pred_check_branch
          %268 = sbr.rel (%p266) target = $region24
        $region23: #{tpu_custom_call.1} parent=11 // pred_region
          %270 = vsyncadd [#allocation11], 0
          %s271 = sshll.u32 %s4, 4
          %s272 = int_to_ptr.hbm [resolvable:$true] %s271
          %s273 = sshll.u32 [#allocation12], 4
          %s274 = int_to_ptr.vmem [resolvable:$true] %s273
          %279 = dma.hbm_to_vmem [thread:$0]  %s272, 512, %s274, [#allocation11], 128, 128, 8
        $region24: #{tpu_custom_call.1} parent=11 // pred_fallthru
          _
        // Predicated region
        $region25: #{tpu_custom_call.1} parent=11 // pred_check
          %p280 = pneg %p174
        $region26: #{tpu_custom_call.1} parent=11 // pred_check_branch
          %282 = sbr.rel (%p280) target = $region28
        $region27: #{tpu_custom_call.1} parent=11 // pred_region
          %284 = vsyncadd [#allocation14], 0
          %s285 = sshll.u32 %s5, 4
          %s286 = int_to_ptr.hbm [resolvable:$true] %s285
          %s287 = sshll.u32 [#allocation13], 4
          %s288 = int_to_ptr.vmem [resolvable:$true] %s287
          %293 = dma.hbm_to_vmem [thread:$0]  %s286, 512, %s288, [#allocation14], 128, 128, 8
        $region28: #{tpu_custom_call.1} parent=11 // pred_fallthru
          _
        // Predicated region
        $region29: #{tpu_custom_call.1} parent=11 // pred_check
          %p294 = pneg %p195
        $region30: #{tpu_custom_call.1} parent=11 // pred_check_branch
          %296 = sbr.rel (%p294) target = $region32
        $region31: #{tpu_custom_call.1} parent=11 // pred_region
          _
        $region32: #{tpu_custom_call.1} parent=11 // pred_fallthru
          _
      $region12: #{tpu_custom_call.1} parent=5 // pred_fallthru
        _
      %p297 = scmp.lt.s32.totalorder %s24, 2
      // Predicated region
      $region33: #{tpu_custom_call.1} parent=5 // pred_check
        %p298 = pneg %p297
      $region34: #{tpu_custom_call.1} parent=5 // pred_check_branch
        %300 = sbr.rel (%p298) target = $region36
      $region35: #{tpu_custom_call.1} parent=5 // pred_region
        // Predicated region
        $region37: #{tpu_custom_call.1} parent=35 // pred_check
          %p301 = pneg %p58
        $region38: #{tpu_custom_call.1} parent=35 // pred_check_branch
          %303 = sbr.rel (%p301) target = $region40
        $region39: #{tpu_custom_call.1} parent=35 // pred_region
          %s304 = sand.u32 %s48, 1
          %s305 = scalar_lea.sflag [#allocation5], %s304
          %s306 = sand.u32 %s48, 1
          %s307 = smul.addr %s306, 16
          %s308 = scalar_lea.vmem [#allocation4], %s307
          %s309 = smul.u32 2, %s32
          %311 = vsyncadd %s305, 0
          %s312 = smul.addr %s31, 2
          %s313 = sadd.s32 %s309, %s312
          %s314 = smul.addr %s313, 8
          %s315 = scalar_lea.hbm %s0, %s314
          %s316 = sshll.u32 %s315, 4
          %s317 = int_to_ptr.hbm [resolvable:$true] %s316
          %s318 = sshll.u32 %s308, 4
          %s319 = int_to_ptr.vmem [resolvable:$true] %s318
          %324 = dma.hbm_to_vmem [thread:$0]  %s317, 256, %s319, %s305, 128, 128, 8
        $region40: #{tpu_custom_call.1} parent=35 // pred_fallthru
          _
        // Predicated region
        $region41: #{tpu_custom_call.1} parent=35 // pred_check
          %p325 = pneg %p84
        $region42: #{tpu_custom_call.1} parent=35 // pred_check_branch
          %327 = sbr.rel (%p325) target = $region44
        $region43: #{tpu_custom_call.1} parent=35 // pred_region
          %s328 = sand.u32 %s24, 1
          %s329 = scalar_lea.sflag [#allocation8], %s328
          %s330 = sand.u32 %s74, 1
          %s331 = smul.addr %s330, 8
          %s332 = scalar_lea.vmem [#allocation7], %s331
          %334 = vsyncadd %s329, 0
          %s335 = smul.addr %s31, 8
          %s336 = scalar_lea.hbm %s1, %s335
          %s338 = sshll.u32 %s336, 4
          %s339 = int_to_ptr.hbm [resolvable:$true] %s338
          %s340 = sshll.u32 %s332, 4
          %s341 = int_to_ptr.vmem [resolvable:$true] %s340
          %343 = dma.hbm_to_vmem [thread:$0]  %s339, 128, %s341, %s329
        $region44: #{tpu_custom_call.1} parent=35 // pred_fallthru
          _
      $region36: #{tpu_custom_call.1} parent=5 // pred_fallthru
        _
      %p344 = scmp.le.s32.totalorder 1, %s24
      %p345 = scmp.lt.s32.totalorder %s24, 3
      %p346 = pnand %p344, %p345
      %p347 = pneg %p346
      // Predicated region
      $region45: #{tpu_custom_call.1} parent=5 // pred_check
        _
      $region46: #{tpu_custom_call.1} parent=5 // pred_check_branch
        %349 = sbr.rel (%p346) target = $region48
      $region47: #{tpu_custom_call.1} parent=5 // pred_region
        %s350 = ssub.s32 %s24, 1
        %s351 = sand.u32 %s51, 1
        %s352 = scalar_lea.sflag [#allocation5], %s351
        %s353 = sand.u32 %s51, 1
        %s354 = smul.addr %s353, 16
        %s355 = scalar_lea.vmem [#allocation4], %s354
        // Predicated region
        $region49: #{tpu_custom_call.1} parent=47 // pred_check
          %p356 = pneg %p64
        $region50: #{tpu_custom_call.1} parent=47 // pred_check_branch
          %358 = sbr.rel (%p356) target = $region52
        $region51: #{tpu_custom_call.1} parent=47 // pred_region
          %360 = dma.done %s352, 256
        $region52: #{tpu_custom_call.1} parent=47 // pred_fallthru
          _
        %s361 = sand.u32 %s29, 1
        %s362 = scalar_lea.sflag [#allocation8], %s361
        %s363 = sand.u32 %s77, 1
        %s364 = smul.addr %s363, 8
        %s365 = scalar_lea.vmem [#allocation7], %s364
        // Predicated region
        $region53: #{tpu_custom_call.1} parent=47 // pred_check
          %p366 = pneg %p90
        $region54: #{tpu_custom_call.1} parent=47 // pred_check_branch
          %368 = sbr.rel (%p366) target = $region56
        $region55: #{tpu_custom_call.1} parent=47 // pred_region
          %370 = dma.done %s362, 128
        $region56: #{tpu_custom_call.1} parent=47 // pred_fallthru
          _
        // Predicated region
        $region57: #{tpu_custom_call.1} parent=47 // pred_check
          %p371 = pneg %p111
        $region58: #{tpu_custom_call.1} parent=47 // pred_check_branch
          %373 = sbr.rel (%p371) target = $region60
        $region59: #{tpu_custom_call.1} parent=47 // pred_region
          %375 = dma.done [#allocation8], 512
        $region60: #{tpu_custom_call.1} parent=47 // pred_fallthru
          _
        // Predicated region
        $region61: #{tpu_custom_call.1} parent=47 // pred_check
          %p376 = pneg %p132
        $region62: #{tpu_custom_call.1} parent=47 // pred_check_branch
          %378 = sbr.rel (%p376) target = $region64
        $region63: #{tpu_custom_call.1} parent=47 // pred_region
          %380 = dma.done [#allocation11], 512
        $region64: #{tpu_custom_call.1} parent=47 // pred_fallthru
          _
        // Predicated region
        $region65: #{tpu_custom_call.1} parent=47 // pred_check
          %p381 = pneg %p153
        $region66: #{tpu_custom_call.1} parent=47 // pred_check_branch
          %383 = sbr.rel (%p381) target = $region68
        $region67: #{tpu_custom_call.1} parent=47 // pred_region
          %385 = dma.done [#allocation11], 512
        $region68: #{tpu_custom_call.1} parent=47 // pred_fallthru
          _
        // Predicated region
        $region69: #{tpu_custom_call.1} parent=47 // pred_check
          %p386 = pneg %p174
        $region70: #{tpu_custom_call.1} parent=47 // pred_check_branch
          %388 = sbr.rel (%p386) target = $region72
        $region71: #{tpu_custom_call.1} parent=47 // pred_region
          %390 = dma.done [#allocation14], 512
        $region72: #{tpu_custom_call.1} parent=47 // pred_fallthru
          _
        %s391 = sand.u32 %s51, 1
        %s392 = scalar_lea.sflag [#allocation5], %s391
        %s393 = sand.u32 %s51, 1
        %s394 = smul.addr %s393, 16
        %s395 = scalar_lea.vmem [#allocation4], %s394
        %p396 = pneg %p64
        %p397 = pneg %p61
        %s398 = sand.u32 %s29, 1
        %s399 = scalar_lea.sflag [#allocation8], %s398
        %s400 = sand.u32 %s77, 1
        %s401 = smul.addr %s400, 8
        %s402 = scalar_lea.vmem [#allocation7], %s401
        %p403 = pneg %p90
        %p404 = pneg %p87
        %p405 = pneg %p111
        %p406 = pneg %p108
        %p407 = pneg %p132
        %p408 = pneg %p129
        %p409 = pneg %p153
        %p410 = pneg %p150
        %p411 = pneg %p174
        %p412 = pneg %p171
        %p413 = pneg %p195
        %p414 = pneg %p192
        %p415 = pneg %p223
        %p416 = pneg %p220
        %s417 = sand.u32 %s210, 1
        %s418 = scalar_lea.sflag [#allocation6], %s417
        %s419 = sand.u32 %s210, 1
        %s420 = smul.addr %s419, 16
        %s421 = scalar_lea.vmem [#allocation15], %s420
        %s422 = smul.u32 2, %s34
        %s423 = smul.u32 2, %s34
        %p424 = scmp.eq.s32.totalorder %s34, 0
        // Predicated region
        $region73: #{tpu_custom_call.1} parent=47 // pred_check
          %p425 = pneg %p424
        $region74: #{tpu_custom_call.1} parent=47 // pred_check_branch
          %427 = sbr.rel (%p425) target = $region76
        $region75: #{tpu_custom_call.1} parent=47 // pred_region
          %v428 = vld [vmem:[%s365] sm:$0xff]
          %v429 = vld [vmem:[#allocation10] sm:$0xff]
          %v430 = vld [vmem:[#allocation10 + $0x8] sm:$0xff]
          %v431 = vld [vmem:[#allocation10 + $0x10] sm:$0xff]
          %v432 = vld [vmem:[#allocation10 + $0x18] sm:$0xff]
          %vm433 = vcmask 261120
          %v435 = vsel %vm433, %v428, 0
          %437 = vmatpush.msra.mxu0 0.0
          %438 = vmatpush.msra.mxu0 0.0
          %439 = vmatpush.msra.mxu0 0.0
          %440 = vmatpush.msra.mxu0 0.0
          %441 = vmatpush.msra.mxu0 0.0
          %442 = vmatpush.msra.mxu0 0.0
          %443 = vmatpush.msra.mxu0 0.0
          %444 = vmatpush.msra.mxu0 0.0
          %445 = vmatpush.msra.mxu0 0.0
          %446 = vmatpush.msra.mxu0 0.0
          %447 = vmatpush.msra.mxu0 0.0
          %448 = vmatpush.msra.mxu0 0.0
          %449 = vmatpush.msra.mxu0 %v432
          %450 = vmatpush.msra.mxu0 %v431
          %451 = vmatpush.msra.mxu0 %v430
          %452 = vmatpush.msra.mxu0 %v429
          %453 = vmatmul.f32.gmra.mxu0 %v435
          %v454 = vpop.f32.mrf.mxu0
          %v455 = vadd.f32 0.0, %v454
          %456 = vdwg.mxu0
          %457 = vst.msk [vmem:[#allocation2] sm:$0xff] %vm433, %v455
          %v458 = vld [vmem:[#allocation12] sm:$0xff]
          %v459 = vld [vmem:[#allocation12 + $0x8] sm:$0xff]
          %v460 = vld [vmem:[#allocation12 + $0x10] sm:$0xff]
          %v461 = vld [vmem:[#allocation12 + $0x18] sm:$0xff]
          %462 = vmatpush.msra.mxu0 0.0
          %463 = vmatpush.msra.mxu0 0.0
          %464 = vmatpush.msra.mxu0 0.0
          %465 = vmatpush.msra.mxu0 0.0
          %466 = vmatpush.msra.mxu0 0.0
          %467 = vmatpush.msra.mxu0 0.0
          %468 = vmatpush.msra.mxu0 0.0
          %469 = vmatpush.msra.mxu0 0.0
          %470 = vmatpush.msra.mxu0 0.0
          %471 = vmatpush.msra.mxu0 0.0
          %472 = vmatpush.msra.mxu0 0.0
          %473 = vmatpush.msra.mxu0 0.0
          %474 = vmatpush.msra.mxu0 %v461
          %475 = vmatpush.msra.mxu0 %v460
          %476 = vmatpush.msra.mxu0 %v459
          %477 = vmatpush.msra.mxu0 %v458
          %478 = vmatmul.f32.gmra.mxu0 %v435
          %v479 = vpop.f32.mrf.mxu0
          %v480 = vadd.f32 0.0, %v479
          %481 = vdwg.mxu0
          %482 = vst.msk [vmem:[#allocation3] sm:$0xff] %vm433, %v480
        $region76: #{tpu_custom_call.1} parent=47 // pred_fallthru
          _
        %v483 = vld [vmem:[%s355] sm:$0xff]
        %v484 = vld [vmem:[%s355 + $0x8] sm:$0xff]
        %v485 = vld [vmem:[#allocation9] sm:$0xff]
        %v486 = vld [vmem:[#allocation9 + $0x8] sm:$0xff]
        %v487 = vld [vmem:[#allocation9 + $0x10] sm:$0xff]
        %v488 = vld [vmem:[#allocation9 + $0x18] sm:$0xff]
        %vm489 = vcmask 261120
        %v491 = vsel %vm489, %v483, 0
        %v494 = vsel %vm489, %v484, 0
        %496 = vmatpush.msra.mxu0 0.0
        %497 = vmatpush.msra.mxu0 0.0
        %498 = vmatpush.msra.mxu0 0.0
        %499 = vmatpush.msra.mxu0 0.0
        %500 = vmatpush.msra.mxu0 0.0
        %501 = vmatpush.msra.mxu0 0.0
        %502 = vmatpush.msra.mxu0 0.0
        %503 = vmatpush.msra.mxu0 0.0
        %504 = vmatpush.msra.mxu0 0.0
        %505 = vmatpush.msra.mxu0 0.0
        %506 = vmatpush.msra.mxu0 0.0
        %507 = vmatpush.msra.mxu0 0.0
        %508 = vmatpush.msra.mxu0 %v488
        %509 = vmatpush.msra.mxu0 %v487
        %510 = vmatpush.msra.mxu0 %v486
        %511 = vmatpush.msra.mxu0 %v485
        %512 = vmatmul.f32.gmra.mxu0 %v491
        %v513 = vpop.f32.mrf.mxu0
        %v514 = vadd.f32 0.0, %v513
        %515 = vmatmul.f32.gmra.mxu0 %v494
        %v516 = vpop.f32.mrf.mxu0
        %v517 = vadd.f32 0.0, %v516
        %518 = vdwg.mxu0
        %v519 = vmul.f32 %v514, 0.35355338
        %v520 = vmul.f32 %v517, 0.35355338
        %v521 = vld [vmem:[#allocation2] sm:$0xff]
        %v522 = vld [vmem:[#allocation3] sm:$0xff]
        %vm523 = vcmask 64512
        %v525 = vsel %vm523, %v519, 0
        %v528 = vsel %vm523, %v520, 0
        %v531 = vsel %vm523, %v521, 0
        %533 = vmatpush.xpose.msra.mxu0 0.0
        %534 = vmatpush.xpose.msra.mxu0 0.0
        %535 = vmatpush.xpose.msra.mxu0 0.0
        %536 = vmatpush.xpose.msra.mxu0 0.0
        %537 = vmatpush.xpose.msra.mxu0 0.0
        %538 = vmatpush.xpose.msra.mxu0 0.0
        %539 = vmatpush.xpose.msra.mxu0 0.0
        %540 = vmatpush.xpose.msra.mxu0 0.0
        %541 = vmatpush.xpose.msra.mxu0 0.0
        %542 = vmatpush.xpose.msra.mxu0 0.0
        %543 = vmatpush.xpose.msra.mxu0 0.0
        %544 = vmatpush.xpose.msra.mxu0 0.0
        %545 = vmatpush.xpose.msra.mxu0 0.0
        %546 = vmatpush.xpose.msra.mxu0 0.0
        %547 = vmatpush.xpose.msra.mxu0 0.0
        %548 = vmatpush.xpose.msra.mxu0 %v531
        %549 = vmatmul.f32.gmra.mxu0 %v525
        %v550 = vpop.f32.mrf.mxu0
        %v551 = vadd.f32 0.0, %v550
        %552 = vmatmul.f32.gmra.mxu0 %v528
        %v553 = vpop.f32.mrf.mxu0
        %v554 = vadd.f32 0.0, %v553
        %555 = vdwg.mxu0
        %v556 = vsel %vm523, %v551, -inf
        %557 = vmax.xlane.f32.xlu0 %v556
        %v558 = vpop.xlane.xlu0 %557
        %v559 = vsel %vm523, %v554, -inf
        %560 = vmax.xlane.f32.xlu0 %v559
        %v561 = vpop.xlane.xlu0 %560
        %v562 = vsub.f32 %v551, %v558
        %v563 = vsub.f32 %v554, %v561
        %v564 = vmul.f32 %v562, 1.442695
        %v565 = vpow.pop %v564
        %v566 = vmul.f32 %v563, 1.442695
        %v567 = vpow.pop %v566
        %v568 = vsel %vm523, %v565, 0.0
        %569 = vadd.xlane.f32.xlu0 %v568
        %v570 = vpop.xlane.xlu0 %569
        %v571 = vsel %vm523, %v567, 0.0
        %572 = vadd.xlane.f32.xlu0 %v571
        %v573 = vpop.xlane.xlu0 %572
        %v575 = vsel %vm523, %v565, 0
        %v578 = vsel %vm523, %v567, 0
        %580 = vmatpush.msra.mxu0 0.0
        %581 = vmatpush.msra.mxu0 0.0
        %582 = vmatpush.msra.mxu0 0.0
        %583 = vmatpush.msra.mxu0 0.0
        %584 = vmatpush.msra.mxu0 0.0
        %585 = vmatpush.msra.mxu0 0.0
        %586 = vmatpush.msra.mxu0 0.0
        %587 = vmatpush.msra.mxu0 0.0
        %588 = vmatpush.msra.mxu0 0.0
        %589 = vmatpush.msra.mxu0 0.0
        %590 = vmatpush.msra.mxu0 0.0
        %591 = vmatpush.msra.mxu0 0.0
        %592 = vmatpush.msra.mxu0 0.0
        %593 = vmatpush.msra.mxu0 0.0
        %594 = vmatpush.msra.mxu0 0.0
        %595 = vmatpush.msra.mxu0 %v522
        %596 = vmatmul.f32.gmra.mxu0 %v575
        %v597 = vpop.f32.mrf.mxu0
        %v598 = vadd.f32 0.0, %v597
        %599 = vmatmul.f32.gmra.mxu0 %v578
        %v600 = vpop.f32.mrf.mxu0
        %v601 = vadd.f32 0.0, %v600
        %602 = vdwg.mxu0
        %v603 = vrcp.pop %v570
        %v604 = vrcp.pop %v573
        %v605 = vmul.f32 %v598, %v603
        %v606 = vmul.f32 %v601, %v604
        %607 = vrot.lane.b32.xlu0 %v519, 120
        %v608 = vpop.permute.xlu0 %607
        %609 = vrot.lane.b32.xlu0 %v520, 120
        %v610 = vpop.permute.xlu0 %609
        %611 = vrot.lane.b32.xlu0 %v521, 120
        %v612 = vpop.permute.xlu0 %611
        %v613 = vsel %vm523, %v608, 0
        %v615 = vsel %vm523, %v610, 0
        %v617 = vsel %vm523, %v612, 0
        %619 = vmatpush.xpose.msra.mxu0 0.0
        %620 = vmatpush.xpose.msra.mxu0 0.0
        %621 = vmatpush.xpose.msra.mxu0 0.0
        %622 = vmatpush.xpose.msra.mxu0 0.0
        %623 = vmatpush.xpose.msra.mxu0 0.0
        %624 = vmatpush.xpose.msra.mxu0 0.0
        %625 = vmatpush.xpose.msra.mxu0 0.0
        %626 = vmatpush.xpose.msra.mxu0 0.0
        %627 = vmatpush.xpose.msra.mxu0 0.0
        %628 = vmatpush.xpose.msra.mxu0 0.0
        %629 = vmatpush.xpose.msra.mxu0 0.0
        %630 = vmatpush.xpose.msra.mxu0 0.0
        %631 = vmatpush.xpose.msra.mxu0 0.0
        %632 = vmatpush.xpose.msra.mxu0 0.0
        %633 = vmatpush.xpose.msra.mxu0 0.0
        %634 = vmatpush.xpose.msra.mxu0 %v617
        %635 = vmatmul.f32.gmra.mxu0 %v613
        %v636 = vpop.f32.mrf.mxu0
        %v637 = vadd.f32 0.0, %v636
        %638 = vmatmul.f32.gmra.mxu0 %v615
        %v639 = vpop.f32.mrf.mxu0
        %v640 = vadd.f32 0.0, %v639
        %641 = vdwg.mxu0
        %v642 = vsel %vm523, %v637, -inf
        %643 = vmax.xlane.f32.xlu0 %v642
        %v644 = vpop.xlane.xlu0 %643
        %v645 = vsel %vm523, %v640, -inf
        %646 = vmax.xlane.f32.xlu0 %v645
        %v647 = vpop.xlane.xlu0 %646
        %v648 = vsub.f32 %v637, %v644
        %v649 = vsub.f32 %v640, %v647
        %v650 = vmul.f32 %v648, 1.442695
        %v651 = vpow.pop %v650
        %v652 = vmul.f32 %v649, 1.442695
        %v653 = vpow.pop %v652
        %v654 = vsel %vm523, %v651, 0.0
        %655 = vadd.xlane.f32.xlu0 %v654
        %v656 = vpop.xlane.xlu0 %655
        %v657 = vsel %vm523, %v653, 0.0
        %658 = vadd.xlane.f32.xlu0 %v657
        %v659 = vpop.xlane.xlu0 %658
        %661 = vrot.lane.b32.xlu0 %v522, 120
        %v662 = vpop.permute.xlu0 %661
        %v665 = vsel %vm523, %v651, 0
        %v668 = vsel %vm523, %v653, 0
        %670 = vmatpush.msra.mxu0 0.0
        %671 = vmatpush.msra.mxu0 0.0
        %672 = vmatpush.msra.mxu0 0.0
        %673 = vmatpush.msra.mxu0 0.0
        %674 = vmatpush.msra.mxu0 0.0
        %675 = vmatpush.msra.mxu0 0.0
        %676 = vmatpush.msra.mxu0 0.0
        %677 = vmatpush.msra.mxu0 0.0
        %678 = vmatpush.msra.mxu0 0.0
        %679 = vmatpush.msra.mxu0 0.0
        %680 = vmatpush.msra.mxu0 0.0
        %681 = vmatpush.msra.mxu0 0.0
        %682 = vmatpush.msra.mxu0 0.0
        %683 = vmatpush.msra.mxu0 0.0
        %684 = vmatpush.msra.mxu0 0.0
        %685 = vmatpush.msra.mxu0 %v662
        %686 = vmatmul.f32.gmra.mxu0 %v665
        %v687 = vpop.f32.mrf.mxu0
        %v688 = vadd.f32 0.0, %v687
        %689 = vmatmul.f32.gmra.mxu0 %v668
        %v690 = vpop.f32.mrf.mxu0
        %v691 = vadd.f32 0.0, %v690
        %692 = vdwg.mxu0
        %v693 = vrcp.pop %v656
        %v694 = vrcp.pop %v659
        %v695 = vmul.f32 %v688, %v693
        %v696 = vmul.f32 %v691, %v694
        %697 = vrot.lane.b32.xlu0 %v519, 112
        %v698 = vpop.permute.xlu0 %697
        %699 = vrot.lane.b32.xlu0 %v520, 112
        %v700 = vpop.permute.xlu0 %699
        %701 = vrot.lane.b32.xlu0 %v521, 112
        %v702 = vpop.permute.xlu0 %701
        %v703 = vsel %vm523, %v698, 0
        %v705 = vsel %vm523, %v700, 0
        %v707 = vsel %vm523, %v702, 0
        %709 = vmatpush.xpose.msra.mxu0 0.0
        %710 = vmatpush.xpose.msra.mxu0 0.0
        %711 = vmatpush.xpose.msra.mxu0 0.0
        %712 = vmatpush.xpose.msra.mxu0 0.0
        %713 = vmatpush.xpose.msra.mxu0 0.0
        %714 = vmatpush.xpose.msra.mxu0 0.0
        %715 = vmatpush.xpose.msra.mxu0 0.0
        %716 = vmatpush.xpose.msra.mxu0 0.0
        %717 = vmatpush.xpose.msra.mxu0 0.0
        %718 = vmatpush.xpose.msra.mxu0 0.0
        %719 = vmatpush.xpose.msra.mxu0 0.0
        %720 = vmatpush.xpose.msra.mxu0 0.0
        %721 = vmatpush.xpose.msra.mxu0 0.0
        %722 = vmatpush.xpose.msra.mxu0 0.0
        %723 = vmatpush.xpose.msra.mxu0 0.0
        %724 = vmatpush.xpose.msra.mxu0 %v707
        %725 = vmatmul.f32.gmra.mxu0 %v703
        %v726 = vpop.f32.mrf.mxu0
        %v727 = vadd.f32 0.0, %v726
        %728 = vmatmul.f32.gmra.mxu0 %v705
        %v729 = vpop.f32.mrf.mxu0
        %v730 = vadd.f32 0.0, %v729
        %731 = vdwg.mxu0
        %v732 = vsel %vm523, %v727, -inf
        %733 = vmax.xlane.f32.xlu0 %v732
        %v734 = vpop.xlane.xlu0 %733
        %v735 = vsel %vm523, %v730, -inf
        %736 = vmax.xlane.f32.xlu0 %v735
        %v737 = vpop.xlane.xlu0 %736
        %v738 = vsub.f32 %v727, %v734
        %v739 = vsub.f32 %v730, %v737
        %v740 = vmul.f32 %v738, 1.442695
        %v741 = vpow.pop %v740
        %v742 = vmul.f32 %v739, 1.442695
        %v743 = vpow.pop %v742
        %v744 = vsel %vm523, %v741, 0.0
        %745 = vadd.xlane.f32.xlu0 %v744
        %v746 = vpop.xlane.xlu0 %745
        %v747 = vsel %vm523, %v743, 0.0
        %748 = vadd.xlane.f32.xlu0 %v747
        %v749 = vpop.xlane.xlu0 %748
        %750 = vrot.lane.b32.xlu0 %v522, 112
        %v751 = vpop.permute.xlu0 %750
        %v754 = vsel %vm523, %v741, 0
        %v757 = vsel %vm523, %v743, 0
        %759 = vmatpush.msra.mxu0 0.0
        %760 = vmatpush.msra.mxu0 0.0
        %761 = vmatpush.msra.mxu0 0.0
        %762 = vmatpush.msra.mxu0 0.0
        %763 = vmatpush.msra.mxu0 0.0
        %764 = vmatpush.msra.mxu0 0.0
        %765 = vmatpush.msra.mxu0 0.0
        %766 = vmatpush.msra.mxu0 0.0
        %767 = vmatpush.msra.mxu0 0.0
        %768 = vmatpush.msra.mxu0 0.0
        %769 = vmatpush.msra.mxu0 0.0
        %770 = vmatpush.msra.mxu0 0.0
        %771 = vmatpush.msra.mxu0 0.0
        %772 = vmatpush.msra.mxu0 0.0
        %773 = vmatpush.msra.mxu0 0.0
        %774 = vmatpush.msra.mxu0 %v751
        %775 = vmatmul.f32.gmra.mxu0 %v754
        %v776 = vpop.f32.mrf.mxu0
        %v777 = vadd.f32 0.0, %v776
        %778 = vmatmul.f32.gmra.mxu0 %v757
        %v779 = vpop.f32.mrf.mxu0
        %v780 = vadd.f32 0.0, %v779
        %781 = vdwg.mxu0
        %v782 = vrcp.pop %v746
        %v783 = vrcp.pop %v749
        %v784 = vmul.f32 %v777, %v782
        %v785 = vmul.f32 %v780, %v783
        %786 = vrot.lane.b32.xlu0 %v519, 104
        %v787 = vpop.permute.xlu0 %786
        %788 = vrot.lane.b32.xlu0 %v520, 104
        %v789 = vpop.permute.xlu0 %788
        %790 = vrot.lane.b32.xlu0 %v521, 104
        %v791 = vpop.permute.xlu0 %790
        %v792 = vsel %vm523, %v787, 0
        %v794 = vsel %vm523, %v789, 0
        %v796 = vsel %vm523, %v791, 0
        %798 = vmatpush.xpose.msra.mxu0 0.0
        %799 = vmatpush.xpose.msra.mxu0 0.0
        %800 = vmatpush.xpose.msra.mxu0 0.0
        %801 = vmatpush.xpose.msra.mxu0 0.0
        %802 = vmatpush.xpose.msra.mxu0 0.0
        %803 = vmatpush.xpose.msra.mxu0 0.0
        %804 = vmatpush.xpose.msra.mxu0 0.0
        %805 = vmatpush.xpose.msra.mxu0 0.0
        %806 = vmatpush.xpose.msra.mxu0 0.0
        %807 = vmatpush.xpose.msra.mxu0 0.0
        %808 = vmatpush.xpose.msra.mxu0 0.0
        %809 = vmatpush.xpose.msra.mxu0 0.0
        %810 = vmatpush.xpose.msra.mxu0 0.0
        %811 = vmatpush.xpose.msra.mxu0 0.0
        %812 = vmatpush.xpose.msra.mxu0 0.0
        %813 = vmatpush.xpose.msra.mxu0 %v796
        %814 = vmatmul.f32.gmra.mxu0 %v792
        %v815 = vpop.f32.mrf.mxu0
        %v816 = vadd.f32 0.0, %v815
        %817 = vmatmul.f32.gmra.mxu0 %v794
        %v818 = vpop.f32.mrf.mxu0
        %v819 = vadd.f32 0.0, %v818
        %820 = vdwg.mxu0
        %v821 = vsel %vm523, %v816, -inf
        %822 = vmax.xlane.f32.xlu0 %v821
        %v823 = vpop.xlane.xlu0 %822
        %v824 = vsel %vm523, %v819, -inf
        %825 = vmax.xlane.f32.xlu0 %v824
        %v826 = vpop.xlane.xlu0 %825
        %v827 = vsub.f32 %v816, %v823
        %v828 = vsub.f32 %v819, %v826
        %v829 = vmul.f32 %v827, 1.442695
        %v830 = vpow.pop %v829
        %v831 = vmul.f32 %v828, 1.442695
        %v832 = vpow.pop %v831
        %v833 = vsel %vm523, %v830, 0.0
        %834 = vadd.xlane.f32.xlu0 %v833
        %v835 = vpop.xlane.xlu0 %834
        %v836 = vsel %vm523, %v832, 0.0
        %837 = vadd.xlane.f32.xlu0 %v836
        %v838 = vpop.xlane.xlu0 %837
        %839 = vrot.lane.b32.xlu0 %v522, 104
        %v840 = vpop.permute.xlu0 %839
        %v843 = vsel %vm523, %v830, 0
        %v846 = vsel %vm523, %v832, 0
        %848 = vmatpush.msra.mxu0 0.0
        %849 = vmatpush.msra.mxu0 0.0
        %850 = vmatpush.msra.mxu0 0.0
        %851 = vmatpush.msra.mxu0 0.0
        %852 = vmatpush.msra.mxu0 0.0
        %853 = vmatpush.msra.mxu0 0.0
        %854 = vmatpush.msra.mxu0 0.0
        %855 = vmatpush.msra.mxu0 0.0
        %856 = vmatpush.msra.mxu0 0.0
        %857 = vmatpush.msra.mxu0 0.0
        %858 = vmatpush.msra.mxu0 0.0
        %859 = vmatpush.msra.mxu0 0.0
        %860 = vmatpush.msra.mxu0 0.0
        %861 = vmatpush.msra.mxu0 0.0
        %862 = vmatpush.msra.mxu0 0.0
        %863 = vmatpush.msra.mxu0 %v840
        %864 = vmatmul.f32.gmra.mxu0 %v843
        %v865 = vpop.f32.mrf.mxu0
        %v866 = vadd.f32 0.0, %v865
        %867 = vmatmul.f32.gmra.mxu0 %v846
        %v868 = vpop.f32.mrf.mxu0
        %v869 = vadd.f32 0.0, %v868
        %870 = vdwg.mxu0
        %v871 = vrcp.pop %v835
        %v872 = vrcp.pop %v838
        %v873 = vmul.f32 %v866, %v871
        %v874 = vmul.f32 %v869, %v872
        %877 = vrot.lane.b32.xlu0 %v695, 8
        %v878 = vpop.permute.xlu0 %877
        %879 = vrot.lane.b32.xlu0 %v696, 8
        %v880 = vpop.permute.xlu0 %879
        %885 = vrot.lane.b32.xlu0 %v784, 16
        %v886 = vpop.permute.xlu0 %885
        %887 = vrot.lane.b32.xlu0 %v785, 16
        %v888 = vpop.permute.xlu0 %887
        %893 = vrot.lane.b32.xlu0 %v873, 24
        %v894 = vpop.permute.xlu0 %893
        %895 = vrot.lane.b32.xlu0 %v874, 24
        %v896 = vpop.permute.xlu0 %895
        %v899 = vsel %vm523, %v605, %v878
        %v900 = vsel %vm523, %v606, %v880
        %vm901 = vcmask 130048
        %v902 = vsel %vm901, %v899, %v886
        %v903 = vsel %vm901, %v900, %v888
        %vm904 = vcmask 195584
        %v905 = vsel %vm904, %v902, %v894
        %v906 = vsel %vm904, %v903, %v896
        %v907 = vld [vmem:[#allocation13] sm:$0xff]
        %v908 = vld [vmem:[#allocation13 + $0x8] sm:$0xff]
        %v909 = vld [vmem:[#allocation13 + $0x10] sm:$0xff]
        %v910 = vld [vmem:[#allocation13 + $0x18] sm:$0xff]
        %v911 = vld [vmem:[%s6] sm:$0x1]
        %v913 = vperm.slane %v911, 0
        %v916 = vsel %vm489, %v905, 0
        %v919 = vsel %vm489, %v906, 0
        %921 = vmatpush.msra.mxu0 0.0
        %922 = vmatpush.msra.mxu0 0.0
        %923 = vmatpush.msra.mxu0 0.0
        %924 = vmatpush.msra.mxu0 0.0
        %925 = vmatpush.msra.mxu0 0.0
        %926 = vmatpush.msra.mxu0 0.0
        %927 = vmatpush.msra.mxu0 0.0
        %928 = vmatpush.msra.mxu0 0.0
        %929 = vmatpush.msra.mxu0 0.0
        %930 = vmatpush.msra.mxu0 0.0
        %931 = vmatpush.msra.mxu0 0.0
        %932 = vmatpush.msra.mxu0 0.0
        %933 = vmatpush.msra.mxu0 %v910
        %934 = vmatpush.msra.mxu0 %v909
        %935 = vmatpush.msra.mxu0 %v908
        %936 = vmatpush.msra.mxu0 %v907
        %937 = vmatmul.f32.gmra.mxu0 %v916
        %v938 = vpop.f32.mrf.mxu0
        %v939 = vadd.f32 %v913, %v938
        %940 = vmatmul.f32.gmra.mxu0 %v919
        %v941 = vpop.f32.mrf.mxu0
        %v942 = vadd.f32 %v913, %v941
        %943 = vdwg.mxu0
        %944 = vst.msk [vmem:[%s421] sm:$0xff] %vm489, %v939
        %945 = vst.msk [vmem:[%s421 + $0x8] sm:$0xff] %vm489, %v942
        %s946 = sand.u32 %s210, 1
        %s947 = scalar_lea.sflag [#allocation6], %s946
        %s948 = sand.u32 %s210, 1
        %s949 = smul.addr %s948, 16
        %s950 = scalar_lea.vmem [#allocation15], %s949
        // Predicated region
        $region77: #{tpu_custom_call.1} parent=47 // pred_check
          %p951 = pneg %p220
        $region78: #{tpu_custom_call.1} parent=47 // pred_check_branch
          %953 = sbr.rel (%p951) target = $region80
        $region79: #{tpu_custom_call.1} parent=47 // pred_region
          %s954 = smul.u32 2, %s34
          %956 = vsyncadd %s947, 0
          %s957 = smul.addr %s33, 2
          %s958 = sadd.s32 %s954, %s957
          %s959 = smul.addr %s958, 8
          %s960 = scalar_lea.hbm %s7, %s959
          %s961 = sshll.u32 %s950, 4
          %s962 = int_to_ptr.vmem [resolvable:$true] %s961
          %s963 = sshll.u32 %s960, 4
          %s964 = int_to_ptr.hbm [resolvable:$true] %s963
          %969 = dma.vmem_to_hbm [thread:$0]  %s962, 256, %s964, %s947, 128, 128, 8
        $region80: #{tpu_custom_call.1} parent=47 // pred_fallthru
          _
      $region48: #{tpu_custom_call.1} parent=5 // pred_fallthru
        _
      %p970 = scmp.le.s32.totalorder 2, %s24
      // Predicated region
      $region81: #{tpu_custom_call.1} parent=5 // pred_check
        %p971 = pneg %p970
      $region82: #{tpu_custom_call.1} parent=5 // pred_check_branch
        %973 = sbr.rel (%p971) target = $region84
      $region83: #{tpu_custom_call.1} parent=5 // pred_region
        %s974 = ssub.s32 %s24, 2
        // Predicated region
        $region85: #{tpu_custom_call.1} parent=83 // pred_check
          %p975 = pneg %p226
        $region86: #{tpu_custom_call.1} parent=83 // pred_check_branch
          %977 = sbr.rel (%p975) target = $region88
        $region87: #{tpu_custom_call.1} parent=83 // pred_region
          %s978 = sand.u32 %s211, 1
          %s979 = scalar_lea.sflag [#allocation6], %s978
          %s980 = sand.u32 %s211, 1
          %s981 = smul.addr %s980, 16
          %s982 = scalar_lea.vmem [#allocation15], %s981
          %984 = dma.done %s979, 256
        $region88: #{tpu_custom_call.1} parent=83 // pred_fallthru
          _
      $region84: #{tpu_custom_call.1} parent=5 // pred_fallthru
        _
    $region6: #{tpu_custom_call.1} parent=1 // loop_footer
      %s28 = sadd.s32 1, %s24
    $region7: #{tpu_custom_call.1} parent=1 // loop_footer_branch
      %23 = sbr.rel target = $region3
    $region8: #{tpu_custom_call.1} parent=1 // loop_exit
      _
    %985 = vsyncpa [#allocation5], 1
    %s986 = scalar_lea.sflag [#allocation5], 1
    %987 = vsyncpa %s986, 1
    %988 = vsyncpa [#allocation8], 1
    %s989 = scalar_lea.sflag [#allocation8], 1
    %990 = vsyncpa %s989, 1
    %991 = vsyncpa [#allocation11], 1
    %992 = vsyncpa [#allocation14], 1
    %993 = vsyncpa [#allocation6], 1
    %s994 = scalar_lea.sflag [#allocation6], 1
    %995 = vsyncpa %s994, 1

// kernel: tpu_custom_call.1
$region0: #{tpu_custom_call.1}
  #allocation0 [shape = 'u32[]', space=smem, size = 0x4, offset = 0x4, fixed_abs, tag = 'smem constant byte address 0x4 - core index']
  #allocation1 [shape = 'u32[72,128]{1,0:T(1,128)}', space=vmem, size = 0x9000, scoped, tag = 'internal scratch']
  #allocation2 [shape = 'f32[8,32]{1,0:T(8,128)}', space=vmem, size = 0x1000, scoped, tag = 'scratch operand']
  #allocation3 [shape = 'f32[8,32]{1,0:T(8,128)}', space=vmem, size = 0x1000, scoped, tag = 'scratch operand']
  %s0 = inlined_call_operand.hbm [shape: f32[2,16,32], index: 0, kind: input, shape index: {}]
  %s1 = inlined_call_operand.hbm [shape: f32[2,8,32], index: 1, kind: input, shape index: {}]
  %s2 = inlined_call_operand.hbm [shape: f32[32,32], index: 2, kind: input, shape index: {}]
  %s3 = inlined_call_operand.hbm [shape: f32[32,32], index: 3, kind: input, shape index: {}]
  %s4 = inlined_call_operand.hbm [shape: f32[32,32], index: 4, kind: input, shape index: {}]
  %s5 = inlined_call_operand.hbm [shape: f32[32,32], index: 5, kind: input, shape index: {}]
  %s6 = inlined_call_operand.vmem [shape: f32[1,32], index: 6, kind: input, shape index: {}]
  %s7 = inlined_call_operand.hbm [shape: f32[2,16,32], index: 7, kind: output, shape index: {}]
  %s8 = sld [smem:[#allocation0]]
  $region89: #{tpu_custom_call.1} parent=0
    _
  %s10 = ssub.s32 1, %s8
  %s11 = scalar_select 0, %s10, %s8
  $region1: #{tpu_custom_call.1} parent=0
    #allocation4 [shape = 'u8[16384]{0}', space=vmem, size = 0x4000, scoped, tag = 'input window, operand 0']
    #allocation5 [shape = 's32[2]{0}', space=sflag, size = 0x8, scoped, tag = 'scoped memory for tpu_custom_call.1']
    #allocation6 [shape = 's32[2]{0}', space=sflag, size = 0x8, scoped, tag = 'scoped memory for tpu_custom_call.1']
    #allocation7 [shape = 'u8[8192]{0}', space=vmem, size = 0x2000, scoped, tag = 'input window, operand 1']
    #allocation8 [shape = 's32[2]{0}', space=sflag, size = 0x8, scoped, tag = 'scoped memory for tpu_custom_call.1']
    #allocation9 [shape = 'u8[16384]{0}', space=vmem, size = 0x4000, scoped, tag = 'input window, operand 2, single buffered']
    #allocation10 [shape = 'u8[16384]{0}', space=vmem, size = 0x4000, scoped, tag = 'input window, operand 3, single buffered']
    #allocation11 [shape = 's32[1]{0}', space=sflag, size = 0x4, scoped, tag = 'scoped memory for tpu_custom_call.1']
    #allocation12 [shape = 'u8[16384]{0}', space=vmem, size = 0x4000, scoped, tag = 'input window, operand 4, single buffered']
    #allocation13 [shape = 'u8[16384]{0}', space=vmem, size = 0x4000, scoped, tag = 'input window, operand 5, single buffered']
    #allocation14 [shape = 's32[1]{0}', space=sflag, size = 0x4, scoped, tag = 'scoped memory for tpu_custom_call.1']
    #allocation15 [shape = 'u8[16384]{0}', space=vmem, size = 0x4000, scoped, tag = 'output window, operand 0']
    %12 = vsyncpa [#allocation5], 0
    %s13 = scalar_lea.sflag [#allocation5], 1
    %14 = vsyncpa %s13, 0
    %15 = vsyncpa [#allocation8], 0
    %s16 = scalar_lea.sflag [#allocation8], 1
    %17 = vsyncpa %s16, 0
    %18 = vsyncpa [#allocation11], 0
    %19 = vsyncpa [#allocation14], 0
    %20 = vsyncpa [#allocation6], 0
    %s21 = scalar_lea.sflag [#allocation6], 1
    %22 = vsyncpa %s21, 0
    loop: start=0, step=1, limit=4
    $region2: #{tpu_custom_call.1} parent=1 // loop_pre_header
      _
    $region3: #{tpu_custom_call.1} parent=1 // loop_header
      %s24 = sphi 0, %s28
      %p25 = scmp.ge.s32.totalorder %s24, 4
      %s31 = sphi 0, %s43
      %s32 = sphi 0, %s39
      %s33 = sphi 0, %s31
      %s34 = sphi 0, %s32
      %s35 = sphi 0, %s33
      %s36 = sphi 0, %s34
      %s48 = sphi 0, %s50
      %s51 = sphi 0, %s48
      %s52 = sphi 0, %s51
      %s68 = sphi 0, %s52
      %s74 = sphi 0, %s76
      %s77 = sphi 0, %s74
      %s78 = sphi 0, %s77
      %s94 = sphi 0, %s78
      %s98 = sphi 0, %s98
      %s100 = sphi 0, %s98
      %s101 = sphi 0, %s100
      %s115 = sphi 0, %s101
      %s119 = sphi 0, %s119
      %s121 = sphi 0, %s119
      %s122 = sphi 0, %s121
      %s136 = sphi 0, %s122
      %s140 = sphi 0, %s140
      %s142 = sphi 0, %s140
      %s143 = sphi 0, %s142
      %s157 = sphi 0, %s143
      %s161 = sphi 0, %s161
      %s163 = sphi 0, %s161
      %s164 = sphi 0, %s163
      %s178 = sphi 0, %s164
      %s182 = sphi 0, %s182
      %s184 = sphi 0, %s182
      %s185 = sphi 0, %s184
      %s199 = sphi 0, %s185
      %s207 = sphi 0, %s209
      %s210 = sphi 0, %s207
      %s211 = sphi 0, %s210
      %s227 = sphi 0, %s211
    $region4: #{tpu_custom_call.1} parent=1 // loop_header_branch
      %27 = sbr.rel (%p25) target = $region8
    $region5: #{tpu_custom_call.1} parent=1 // loop_body
      %s29 = ssub.s32 %s24, 1
      %s30 = ssub.s32 %s24, 2
      %s37 = sadd.s32 1, %s32
      %p38 = scmp.ge.s32.totalorder %s37, 1
      %s39 = scalar_select %p38, 0, %s37
      %s40 = sadd.s32 1, %s31
      %s41 = scalar_select %p38, %s40, %s31
      %p42 = scmp.ge.s32.totalorder %s41, 2
      %s43 = scalar_select %p42, 0, %s41
      %s44 = ssub.s32 %s31, %s43
      %s45 = ssub.s32 %s32, %s39
      %s46 = sor.u32 %s44, %s45
      %p47 = scmp.eq.s32.totalorder %s46, 0
      %s49 = sadd.s32 %s48, 1
      %s50 = scalar_select %p47, %s48, %s49
      %p53 = pneg %p47
      %p54 = scmp.eq.s32.totalorder %s24, 1
      %p55 = por %p53, %p54
      %p56 = scmp.ne.s32.totalorder %s48, %s51
      %p57 = scmp.eq.s32.totalorder %s24, 0
      %p58 = por %p56, %p57
      %p59 = scmp.ne.s32.totalorder %s48, %s51
      %p60 = scmp.eq.s32.totalorder %s29, 1
      %p61 = por %p59, %p60
      %p62 = scmp.ne.s32.totalorder %s51, %s52
      %p63 = scmp.eq.s32.totalorder %s29, 0
      %p64 = por %p62, %p63
      %p65 = scmp.ne.s32.totalorder %s51, %s52
      %p66 = scmp.eq.s32.totalorder %s30, 1
      %p67 = por %p65, %p66
      %p69 = scmp.ne.s32.totalorder %s52, %s68
      %p70 = scmp.eq.s32.totalorder %s30, 0
      %p71 = por %p69, %p70
      %s72 = ssub.s32 %s31, %s43
      %p73 = scmp.eq.s32.totalorder %s72, 0
      %s75 = sadd.s32 %s74, 1
      %s76 = scalar_select %p73, %s74, %s75
      %p79 = pneg %p73
      %p80 = scmp.eq.s32.totalorder %s24, 1
      %p81 = por %p79, %p80
      %p82 = scmp.ne.s32.totalorder %s74, %s77
      %p83 = scmp.eq.s32.totalorder %s24, 0
      %p84 = por %p82, %p83
      %p85 = scmp.ne.s32.totalorder %s74, %s77
      %p86 = scmp.eq.s32.totalorder %s29, 1
      %p87 = por %p85, %p86
      %p88 = scmp.ne.s32.totalorder %s77, %s78
      %p89 = scmp.eq.s32.totalorder %s29, 0
      %p90 = por %p88, %p89
      %p91 = scmp.ne.s32.totalorder %s77, %s78
      %p92 = scmp.eq.s32.totalorder %s30, 1
      %p93 = por %p91, %p92
      %p95 = scmp.ne.s32.totalorder %s78, %s94
      %p96 = scmp.eq.s32.totalorder %s30, 0
      %p97 = por %p95, %p96
      %s99 = sadd.s32 %s98, 1
      %p102 = scmp.eq.s32.totalorder %s24, 1
      %p103 = scmp.ne.s32.totalorder %s98, %s100
      %p104 = scmp.eq.s32.totalorder %s24, 0
      %p105 = por %p103, %p104
      %p106 = scmp.ne.s32.totalorder %s98, %s100
      %p107 = scmp.eq.s32.totalorder %s29, 1
      %p108 = por %p106, %p107
      %p109 = scmp.ne.s32.totalorder %s100, %s101
      %p110 = scmp.eq.s32.totalorder %s29, 0
      %p111 = por %p109, %p110
      %p112 = scmp.ne.s32.totalorder %s100, %s101
      %p113 = scmp.eq.s32.totalorder %s30, 1
      %p114 = por %p112, %p113
      %p116 = scmp.ne.s32.totalorder %s101, %s115
      %p117 = scmp.eq.s32.totalorder %s30, 0
      %p118 = por %p116, %p117
      %s120 = sadd.s32 %s119, 1
      %p123 = scmp.eq.s32.totalorder %s24, 1
      %p124 = scmp.ne.s32.totalorder %s119, %s121
      %p125 = scmp.eq.s32.totalorder %s24, 0
      %p126 = por %p124, %p125
      %p127 = scmp.ne.s32.totalorder %s119, %s121
      %p128 = scmp.eq.s32.totalorder %s29, 1
      %p129 = por %p127, %p128
      %p130 = scmp.ne.s32.totalorder %s121, %s122
      %p131 = scmp.eq.s32.totalorder %s29, 0
      %p132 = por %p130, %p131
      %p133 = scmp.ne.s32.totalorder %s121, %s122
      %p134 = scmp.eq.s32.totalorder %s30, 1
      %p135 = por %p133, %p134
      %p137 = scmp.ne.s32.totalorder %s122, %s136
      %p138 = scmp.eq.s32.totalorder %s30, 0
      %p139 = por %p137, %p138
      %s141 = sadd.s32 %s140, 1
      %p144 = scmp.eq.s32.totalorder %s24, 1
      %p145 = scmp.ne.s32.totalorder %s140, %s142
      %p146 = scmp.eq.s32.totalorder %s24, 0
      %p147 = por %p145, %p146
      %p148 = scmp.ne.s32.totalorder %s140, %s142
      %p149 = scmp.eq.s32.totalorder %s29, 1
      %p150 = por %p148, %p149
      %p151 = scmp.ne.s32.totalorder %s142, %s143
      %p152 = scmp.eq.s32.totalorder %s29, 0
      %p153 = por %p151, %p152
      %p154 = scmp.ne.s32.totalorder %s142, %s143
      %p155 = scmp.eq.s32.totalorder %s30, 1
      %p156 = por %p154, %p155
      %p158 = scmp.ne.s32.totalorder %s143, %s157
      %p159 = scmp.eq.s32.totalorder %s30, 0
      %p160 = por %p158, %p159
      %s162 = sadd.s32 %s161, 1
      %p165 = scmp.eq.s32.totalorder %s24, 1
      %p166 = scmp.ne.s32.totalorder %s161, %s163
      %p167 = scmp.eq.s32.totalorder %s24, 0
      %p168 = por %p166, %p167
      %p169 = scmp.ne.s32.totalorder %s161, %s163
      %p170 = scmp.eq.s32.totalorder %s29, 1
      %p171 = por %p169, %p170
      %p172 = scmp.ne.s32.totalorder %s163, %s164
      %p173 = scmp.eq.s32.totalorder %s29, 0
      %p174 = por %p172, %p173
      %p175 = scmp.ne.s32.totalorder %s163, %s164
      %p176 = scmp.eq.s32.totalorder %s30, 1
      %p177 = por %p175, %p176
      %p179 = scmp.ne.s32.totalorder %s164, %s178
      %p180 = scmp.eq.s32.totalorder %s30, 0
      %p181 = por %p179, %p180
      %s183 = sadd.s32 %s182, 1
      %p186 = scmp.eq.s32.totalorder %s24, 1
      %p187 = scmp.ne.s32.totalorder %s182, %s184
      %p188 = scmp.eq.s32.totalorder %s24, 0
      %p189 = por %p187, %p188
      %p190 = scmp.ne.s32.totalorder %s182, %s184
      %p191 = scmp.eq.s32.totalorder %s29, 1
      %p192 = por %p190, %p191
      %p193 = scmp.ne.s32.totalorder %s184, %s185
      %p194 = scmp.eq.s32.totalorder %s29, 0
      %p195 = por %p193, %p194
      %p196 = scmp.ne.s32.totalorder %s184, %s185
      %p197 = scmp.eq.s32.totalorder %s30, 1
      %p198 = por %p196, %p197
      %p200 = scmp.ne.s32.totalorder %s185, %s199
      %p201 = scmp.eq.s32.totalorder %s30, 0
      %p202 = por %p200, %p201
      %s203 = ssub.s32 %s31, %s43
      %s204 = ssub.s32 %s32, %s39
      %s205 = sor.u32 %s203, %s204
      %p206 = scmp.eq.s32.totalorder %s205, 0
      %s208 = sadd.s32 %s207, 1
      %s209 = scalar_select %p206, %s207, %s208
      %p212 = pneg %p206
      %p213 = scmp.eq.s32.totalorder %s24, 1
      %p214 = por %p212, %p213
      %p215 = scmp.ne.s32.totalorder %s207, %s210
      %p216 = scmp.eq.s32.totalorder %s24, 0
      %p217 = por %p215, %p216
      %p218 = scmp.ne.s32.totalorder %s207, %s210
      %p219 = scmp.eq.s32.totalorder %s29, 1
      %p220 = por %p218, %p219
      %p221 = scmp.ne.s32.totalorder %s210, %s211
      %p222 = scmp.eq.s32.totalorder %s29, 0
      %p223 = por %p221, %p222
      %p224 = scmp.ne.s32.totalorder %s210, %s211
      %p225 = scmp.eq.s32.totalorder %s30, 1
      %p226 = por %p224, %p225
      %p228 = scmp.ne.s32.totalorder %s211, %s227
      %p229 = scmp.eq.s32.totalorder %s30, 0
      %p230 = por %p228, %p229
      %p231 = scmp.le.s32.totalorder 1, %s24
      %p232 = scmp.lt.s32.totalorder %s24, 3
      %p233 = pnand %p231, %p232
      %p234 = pneg %p233
      // Predicated region
      $region9: #{tpu_custom_call.1} parent=5 // pred_check
        _
      $region10: #{tpu_custom_call.1} parent=5 // pred_check_branch
        %236 = sbr.rel (%p233) target = $region12
      $region11: #{tpu_custom_call.1} parent=5 // pred_region
        %s237 = ssub.s32 %s24, 1
        // Predicated region
        $region13: #{tpu_custom_call.1} parent=11 // pred_check
          %p238 = pneg %p111
        $region14: #{tpu_custom_call.1} parent=11 // pred_check_branch
          %240 = sbr.rel (%p238) target = $region16
        $region15: #{tpu_custom_call.1} parent=11 // pred_region
          %242 = vsyncadd [#allocation8], 0
          %s243 = sshll.u32 %s2, 4
          %s244 = int_to_ptr.hbm [resolvable:$true] %s243
          %s245 = sshll.u32 [#allocation9], 4
          %s246 = int_to_ptr.vmem [resolvable:$true] %s245
          %251 = dma.hbm_to_vmem [thread:$0]  %s244, 512, %s246, [#allocation8], 128, 128, 8
        $region16: #{tpu_custom_call.1} parent=11 // pred_fallthru
          _
        // Predicated region
        $region17: #{tpu_custom_call.1} parent=11 // pred_check
          %p252 = pneg %p132
        $region18: #{tpu_custom_call.1} parent=11 // pred_check_branch
          %254 = sbr.rel (%p252) target = $region20
        $region19: #{tpu_custom_call.1} parent=11 // pred_region
          %256 = vsyncadd [#allocation11], 0
          %s257 = sshll.u32 %s3, 4
          %s258 = int_to_ptr.hbm [resolvable:$true] %s257
          %s259 = sshll.u32 [#allocation10], 4
          %s260 = int_to_ptr.vmem [resolvable:$true] %s259
          %265 = dma.hbm_to_vmem [thread:$0]  %s258, 512, %s260, [#allocation11], 128, 128, 8
        $region20: #{tpu_custom_call.1} parent=11 // pred_fallthru
          _
        // Predicated region
        $region21: #{tpu_custom_call.1} parent=11 // pred_check
          %p266 = pneg %p153
        $region22: #{tpu_custom_call.1} parent=11 // pred_check_branch
          %268 = sbr.rel (%p266) target = $region24
        $region23: #{tpu_custom_call.1} parent=11 // pred_region
          %270 = vsyncadd [#allocation11], 0
          %s271 = sshll.u32 %s4, 4
          %s272 = int_to_ptr.hbm [resolvable:$true] %s271
          %s273 = sshll.u32 [#allocation12], 4
          %s274 = int_to_ptr.vmem [resolvable:$true] %s273
          %279 = dma.hbm_to_vmem [thread:$0]  %s272, 512, %s274, [#allocation11], 128, 128, 8
        $region24: #{tpu_custom_call.1} parent=11 // pred_fallthru
          _
        // Predicated region
        $region25: #{tpu_custom_call.1} parent=11 // pred_check
          %p280 = pneg %p174
        $region26: #{tpu_custom_call.1} parent=11 // pred_check_branch
          %282 = sbr.rel (%p280) target = $region28
        $region27: #{tpu_custom_call.1} parent=11 // pred_region
          %284 = vsyncadd [#allocation14], 0
          %s285 = sshll.u32 %s5, 4
          %s286 = int_to_ptr.hbm [resolvable:$true] %s285
          %s287 = sshll.u32 [#allocation13], 4
          %s288 = int_to_ptr.vmem [resolvable:$true] %s287
          %293 = dma.hbm_to_vmem [thread:$0]  %s286, 512, %s288, [#allocation14], 128, 128, 8
        $region28: #{tpu_custom_call.1} parent=11 // pred_fallthru
          _
        // Predicated region
        $region29: #{tpu_custom_call.1} parent=11 // pred_check
          %p294 = pneg %p195
        $region30: #{tpu_custom_call.1} parent=11 // pred_check_branch
          %296 = sbr.rel (%p294) target = $region32
        $region31: #{tpu_custom_call.1} parent=11 // pred_region
          _
        $region32: #{tpu_custom_call.1} parent=11 // pred_fallthru
          _
      $region12: #{tpu_custom_call.1} parent=5 // pred_fallthru
        _
      %p297 = scmp.lt.s32.totalorder %s24, 2
      // Predicated region
      $region33: #{tpu_custom_call.1} parent=5 // pred_check
        %p298 = pneg %p297
      $region34: #{tpu_custom_call.1} parent=5 // pred_check_branch
        %300 = sbr.rel (%p298) target = $region36
      $region35: #{tpu_custom_call.1} parent=5 // pred_region
        // Predicated region
        $region37: #{tpu_custom_call.1} parent=35 // pred_check
          %p301 = pneg %p58
        $region38: #{tpu_custom_call.1} parent=35 // pred_check_branch
          %303 = sbr.rel (%p301) target = $region40
        $region39: #{tpu_custom_call.1} parent=35 // pred_region
          %s304 = sand.u32 %s48, 1
          %s305 = scalar_lea.sflag [#allocation5], %s304
          %s306 = sand.u32 %s48, 1
          %s307 = smul.addr %s306, 16
          %s308 = scalar_lea.vmem [#allocation4], %s307
          %s309 = smul.u32 2, %s32
          %311 = vsyncadd %s305, 0
          %s312 = smul.addr %s31, 2
          %s313 = sadd.s32 %s309, %s312
          %s314 = smul.addr %s313, 8
          %s315 = scalar_lea.hbm %s0, %s314
          %s316 = sshll.u32 %s315, 4
          %s317 = int_to_ptr.hbm [resolvable:$true] %s316
          %s318 = sshll.u32 %s308, 4
          %s319 = int_to_ptr.vmem [resolvable:$true] %s318
          %324 = dma.hbm_to_vmem [thread:$0]  %s317, 256, %s319, %s305, 128, 128, 8
        $region40: #{tpu_custom_call.1} parent=35 // pred_fallthru
          _
        // Predicated region
        $region41: #{tpu_custom_call.1} parent=35 // pred_check
          %p325 = pneg %p84
        $region42: #{tpu_custom_call.1} parent=35 // pred_check_branch
          %327 = sbr.rel (%p325) target = $region44
        $region43: #{tpu_custom_call.1} parent=35 // pred_region
          %s328 = sand.u32 %s24, 1
          %s329 = scalar_lea.sflag [#allocation8], %s328
          %s330 = sand.u32 %s74, 1
          %s331 = smul.addr %s330, 8
          %s332 = scalar_lea.vmem [#allocation7], %s331
          %334 = vsyncadd %s329, 0
          %s335 = smul.addr %s31, 8
          %s336 = scalar_lea.hbm %s1, %s335
          %s338 = sshll.u32 %s336, 4
          %s339 = int_to_ptr.hbm [resolvable:$true] %s338
          %s340 = sshll.u32 %s332, 4
          %s341 = int_to_ptr.vmem [resolvable:$true] %s340
          %343 = dma.hbm_to_vmem [thread:$0]  %s339, 128, %s341, %s329
        $region44: #{tpu_custom_call.1} parent=35 // pred_fallthru
          _
      $region36: #{tpu_custom_call.1} parent=5 // pred_fallthru
        _
      %p344 = scmp.le.s32.totalorder 1, %s24
      %p345 = scmp.lt.s32.totalorder %s24, 3
      %p346 = pnand %p344, %p345
      %p347 = pneg %p346
      // Predicated region
      $region45: #{tpu_custom_call.1} parent=5 // pred_check
        _
      $region46: #{tpu_custom_call.1} parent=5 // pred_check_branch
        %349 = sbr.rel (%p346) target = $region48
      $region47: #{tpu_custom_call.1} parent=5 // pred_region
        %s350 = ssub.s32 %s24, 1
        %s351 = sand.u32 %s51, 1
        %s352 = scalar_lea.sflag [#allocation5], %s351
        %s353 = sand.u32 %s51, 1
        %s354 = smul.addr %s353, 16
        %s355 = scalar_lea.vmem [#allocation4], %s354
        // Predicated region
        $region49: #{tpu_custom_call.1} parent=47 // pred_check
          %p356 = pneg %p64
        $region50: #{tpu_custom_call.1} parent=47 // pred_check_branch
          %358 = sbr.rel (%p356) target = $region52
        $region51: #{tpu_custom_call.1} parent=47 // pred_region
          %360 = dma.done %s352, 256
        $region52: #{tpu_custom_call.1} parent=47 // pred_fallthru
          _
        %s361 = sand.u32 %s29, 1
        %s362 = scalar_lea.sflag [#allocation8], %s361
        %s363 = sand.u32 %s77, 1
        %s364 = smul.addr %s363, 8
        %s365 = scalar_lea.vmem [#allocation7], %s364
        // Predicated region
        $region53: #{tpu_custom_call.1} parent=47 // pred_check
          %p366 = pneg %p90
        $region54: #{tpu_custom_call.1} parent=47 // pred_check_branch
          %368 = sbr.rel (%p366) target = $region56
        $region55: #{tpu_custom_call.1} parent=47 // pred_region
          %370 = dma.done %s362, 128
        $region56: #{tpu_custom_call.1} parent=47 // pred_fallthru
          _
        // Predicated region
        $region57: #{tpu_custom_call.1} parent=47 // pred_check
          %p371 = pneg %p111
        $region58: #{tpu_custom_call.1} parent=47 // pred_check_branch
          %373 = sbr.rel (%p371) target = $region60
        $region59: #{tpu_custom_call.1} parent=47 // pred_region
          %375 = dma.done [#allocation8], 512
        $region60: #{tpu_custom_call.1} parent=47 // pred_fallthru
          _
        // Predicated region
        $region61: #{tpu_custom_call.1} parent=47 // pred_check
          %p376 = pneg %p132
        $region62: #{tpu_custom_call.1} parent=47 // pred_check_branch
          %378 = sbr.rel (%p376) target = $region64
        $region63: #{tpu_custom_call.1} parent=47 // pred_region
          %380 = dma.done [#allocation11], 512
        $region64: #{tpu_custom_call.1} parent=47 // pred_fallthru
          _
        // Predicated region
        $region65: #{tpu_custom_call.1} parent=47 // pred_check
          %p381 = pneg %p153
        $region66: #{tpu_custom_call.1} parent=47 // pred_check_branch
          %383 = sbr.rel (%p381) target = $region68
        $region67: #{tpu_custom_call.1} parent=47 // pred_region
          %385 = dma.done [#allocation11], 512
        $region68: #{tpu_custom_call.1} parent=47 // pred_fallthru
          _
        // Predicated region
        $region69: #{tpu_custom_call.1} parent=47 // pred_check
          %p386 = pneg %p174
        $region70: #{tpu_custom_call.1} parent=47 // pred_check_branch
          %388 = sbr.rel (%p386) target = $region72
        $region71: #{tpu_custom_call.1} parent=47 // pred_region
          %390 = dma.done [#allocation14], 512
        $region72: #{tpu_custom_call.1} parent=47 // pred_fallthru
          _
        %s391 = sand.u32 %s51, 1
        %s392 = scalar_lea.sflag [#allocation5], %s391
        %s393 = sand.u32 %s51, 1
        %s394 = smul.addr %s393, 16
        %s395 = scalar_lea.vmem [#allocation4], %s394
        %p396 = pneg %p64
        %p397 = pneg %p61
        %s398 = sand.u32 %s29, 1
        %s399 = scalar_lea.sflag [#allocation8], %s398
        %s400 = sand.u32 %s77, 1
        %s401 = smul.addr %s400, 8
        %s402 = scalar_lea.vmem [#allocation7], %s401
        %p403 = pneg %p90
        %p404 = pneg %p87
        %p405 = pneg %p111
        %p406 = pneg %p108
        %p407 = pneg %p132
        %p408 = pneg %p129
        %p409 = pneg %p153
        %p410 = pneg %p150
        %p411 = pneg %p174
        %p412 = pneg %p171
        %p413 = pneg %p195
        %p414 = pneg %p192
        %p415 = pneg %p223
        %p416 = pneg %p220
        %s417 = sand.u32 %s210, 1
        %s418 = scalar_lea.sflag [#allocation6], %s417
        %s419 = sand.u32 %s210, 1
        %s420 = smul.addr %s419, 16
        %s421 = scalar_lea.vmem [#allocation15], %s420
        %s422 = smul.u32 2, %s34
        %s423 = smul.u32 2, %s34
        %p424 = scmp.eq.s32.totalorder %s34, 0
        // Predicated region
        $region73: #{tpu_custom_call.1} parent=47 // pred_check
          %p425 = pneg %p424
        $region74: #{tpu_custom_call.1} parent=47 // pred_check_branch
          %427 = sbr.rel (%p425) target = $region76
        $region75: #{tpu_custom_call.1} parent=47 // pred_region
          %v428 = vld [vmem:[%s365] sm:$0xff]
          %v429 = vld [vmem:[#allocation10] sm:$0xff]
          %v430 = vld [vmem:[#allocation10 + $0x8] sm:$0xff]
          %v431 = vld [vmem:[#allocation10 + $0x10] sm:$0xff]
          %v432 = vld [vmem:[#allocation10 + $0x18] sm:$0xff]
          %vm433 = vcmask 261120
          %v435 = vsel %vm433, %v428, 0
          %437 = vmatpush.msra.mxu0 0.0
          %438 = vmatpush.msra.mxu0 0.0
          %439 = vmatpush.msra.mxu0 0.0
          %440 = vmatpush.msra.mxu0 0.0
          %441 = vmatpush.msra.mxu0 0.0
          %442 = vmatpush.msra.mxu0 0.0
          %443 = vmatpush.msra.mxu0 0.0
          %444 = vmatpush.msra.mxu0 0.0
          %445 = vmatpush.msra.mxu0 0.0
          %446 = vmatpush.msra.mxu0 0.0
          %447 = vmatpush.msra.mxu0 0.0
          %448 = vmatpush.msra.mxu0 0.0
          %449 = vmatpush.msra.mxu0 %v432
          %450 = vmatpush.msra.mxu0 %v431
          %451 = vmatpush.msra.mxu0 %v430
          %452 = vmatpush.msra.mxu0 %v429
          %453 = vmatmul.f32.gmra.mxu0 %v435
          %v454 = vpop.f32.mrf.mxu0
          %v455 = vadd.f32 0.0, %v454
          %456 = vdwg.mxu0
          %457 = vst.msk [vmem:[#allocation2] sm:$0xff] %vm433, %v455
          %v458 = vld [vmem:[#allocation12] sm:$0xff]
          %v459 = vld [vmem:[#allocation12 + $0x8] sm:$0xff]
          %v460 = vld [vmem:[#allocation12 + $0x10] sm:$0xff]
          %v461 = vld [vmem:[#allocation12 + $0x18] sm:$0xff]
          %462 = vmatpush.msra.mxu0 0.0
          %463 = vmatpush.msra.mxu0 0.0
          %464 = vmatpush.msra.mxu0 0.0
          %465 = vmatpush.msra.mxu0 0.0
          %466 = vmatpush.msra.mxu0 0.0
          %467 = vmatpush.msra.mxu0 0.0
          %468 = vmatpush.msra.mxu0 0.0
          %469 = vmatpush.msra.mxu0 0.0
          %470 = vmatpush.msra.mxu0 0.0
          %471 = vmatpush.msra.mxu0 0.0
          %472 = vmatpush.msra.mxu0 0.0
          %473 = vmatpush.msra.mxu0 0.0
          %474 = vmatpush.msra.mxu0 %v461
          %475 = vmatpush.msra.mxu0 %v460
          %476 = vmatpush.msra.mxu0 %v459
          %477 = vmatpush.msra.mxu0 %v458
          %478 = vmatmul.f32.gmra.mxu0 %v435
          %v479 = vpop.f32.mrf.mxu0
          %v480 = vadd.f32 0.0, %v479
          %481 = vdwg.mxu0
          %482 = vst.msk [vmem:[#allocation3] sm:$0xff] %vm433, %v480
        $region76: #{tpu_custom_call.1} parent=47 // pred_fallthru
          _
        %v483 = vld [vmem:[%s355] sm:$0xff]
        %v484 = vld [vmem:[%s355 + $0x8] sm:$0xff]
        %v485 = vld [vmem:[#allocation9] sm:$0xff]
        %v486 = vld [vmem:[#allocation9 + $0x8] sm:$0xff]
        %v487 = vld [vmem:[#allocation9 + $0x10] sm:$0xff]
        %v488 = vld [vmem:[#allocation9 + $0x18] sm:$0xff]
        %vm489 = vcmask 261120
        %v491 = vsel %vm489, %v483, 0
        %v494 = vsel %vm489, %v484, 0
        %496 = vmatpush.msra.mxu0 0.0
        %497 = vmatpush.msra.mxu0 0.0
        %498 = vmatpush.msra.mxu0 0.0
        %499 = vmatpush.msra.mxu0 0.0
        %500 = vmatpush.msra.mxu0 0.0
        %501 = vmatpush.msra.mxu0 0.0
        %502 = vmatpush.msra.mxu0 0.0
        %503 = vmatpush.msra.mxu0 0.0
        %504 = vmatpush.msra.mxu0 0.0
        %505 = vmatpush.msra.mxu0 0.0
        %506 = vmatpush.msra.mxu0 0.0
        %507 = vmatpush.msra.mxu0 0.0
        %508 = vmatpush.msra.mxu0 %v488
        %509 = vmatpush.msra.mxu0 %v487
        %510 = vmatpush.msra.mxu0 %v486
        %511 = vmatpush.msra.mxu0 %v485
        %512 = vmatmul.f32.gmra.mxu0 %v491
        %v513 = vpop.f32.mrf.mxu0
        %v514 = vadd.f32 0.0, %v513
        %515 = vmatmul.f32.gmra.mxu0 %v494
        %v516 = vpop.f32.mrf.mxu0
        %v517 = vadd.f32 0.0, %v516
        %518 = vdwg.mxu0
        %v519 = vmul.f32 %v514, 0.35355338
        %v520 = vmul.f32 %v517, 0.35355338
        %v521 = vld [vmem:[#allocation2] sm:$0xff]
        %v522 = vld [vmem:[#allocation3] sm:$0xff]
        %vm523 = vcmask 64512
        %v525 = vsel %vm523, %v519, 0
        %v528 = vsel %vm523, %v520, 0
        %v531 = vsel %vm523, %v521, 0
        %533 = vmatpush.xpose.msra.mxu0 0.0
        %534 = vmatpush.xpose.msra.mxu0 0.0
        %535 = vmatpush.xpose.msra.mxu0 0.0
        %536 = vmatpush.xpose.msra.mxu0 0.0
        %537 = vmatpush.xpose.msra.mxu0 0.0
        %538 = vmatpush.xpose.msra.mxu0 0.0
        %539 = vmatpush.xpose.msra.mxu0 0.0
        %540 = vmatpush.xpose.msra.mxu0 0.0
        %541 = vmatpush.xpose.msra.mxu0 0.0
        %542 = vmatpush.xpose.msra.mxu0 0.0
        %543 = vmatpush.xpose.msra.mxu0 0.0
        %544 = vmatpush.xpose.msra.mxu0 0.0
        %545 = vmatpush.xpose.msra.mxu0 0.0
        %546 = vmatpush.xpose.msra.mxu0 0.0
        %547 = vmatpush.xpose.msra.mxu0 0.0
        %548 = vmatpush.xpose.msra.mxu0 %v531
        %549 = vmatmul.f32.gmra.mxu0 %v525
        %v550 = vpop.f32.mrf.mxu0
        %v551 = vadd.f32 0.0, %v550
        %552 = vmatmul.f32.gmra.mxu0 %v528
        %v553 = vpop.f32.mrf.mxu0
        %v554 = vadd.f32 0.0, %v553
        %555 = vdwg.mxu0
        %v556 = vsel %vm523, %v551, -inf
        %557 = vmax.xlane.f32.xlu0 %v556
        %v558 = vpop.xlane.xlu0 %557
        %v559 = vsel %vm523, %v554, -inf
        %560 = vmax.xlane.f32.xlu0 %v559
        %v561 = vpop.xlane.xlu0 %560
        %v562 = vsub.f32 %v551, %v558
        %v563 = vsub.f32 %v554, %v561
        %v564 = vmul.f32 %v562, 1.442695
        %v565 = vpow.pop %v564
        %v566 = vmul.f32 %v563, 1.442695
        %v567 = vpow.pop %v566
        %v568 = vsel %vm523, %v565, 0.0
        %569 = vadd.xlane.f32.xlu0 %v568
        %v570 = vpop.xlane.xlu0 %569
        %v571 = vsel %vm523, %v567, 0.0
        %572 = vadd.xlane.f32.xlu0 %v571
        %v573 = vpop.xlane.xlu0 %572
        %v575 = vsel %vm523, %v565, 0
        %v578 = vsel %vm523, %v567, 0
        %580 = vmatpush.msra.mxu0 0.0
        %581 = vmatpush.msra.mxu0 0.0
        %582 = vmatpush.msra.mxu0 0.0
        %583 = vmatpush.msra.mxu0 0.0
        %584 = vmatpush.msra.mxu0 0.0
        %585 = vmatpush.msra.mxu0 0.0
        %586 = vmatpush.msra.mxu0 0.0
        %587 = vmatpush.msra.mxu0 0.0
        %588 = vmatpush.msra.mxu0 0.0
        %589 = vmatpush.msra.mxu0 0.0
        %590 = vmatpush.msra.mxu0 0.0
        %591 = vmatpush.msra.mxu0 0.0
        %592 = vmatpush.msra.mxu0 0.0
        %593 = vmatpush.msra.mxu0 0.0
        %594 = vmatpush.msra.mxu0 0.0
        %595 = vmatpush.msra.mxu0 %v522
        %596 = vmatmul.f32.gmra.mxu0 %v575
        %v597 = vpop.f32.mrf.mxu0
        %v598 = vadd.f32 0.0, %v597
        %599 = vmatmul.f32.gmra.mxu0 %v578
        %v600 = vpop.f32.mrf.mxu0
        %v601 = vadd.f32 0.0, %v600
        %602 = vdwg.mxu0
        %v603 = vrcp.pop %v570
        %v604 = vrcp.pop %v573
        %v605 = vmul.f32 %v598, %v603
        %v606 = vmul.f32 %v601, %v604
        %607 = vrot.lane.b32.xlu0 %v519, 120
        %v608 = vpop.permute.xlu0 %607
        %609 = vrot.lane.b32.xlu0 %v520, 120
        %v610 = vpop.permute.xlu0 %609
        %611 = vrot.lane.b32.xlu0 %v521, 120
        %v612 = vpop.permute.xlu0 %611
        %v613 = vsel %vm523, %v608, 0
        %v615 = vsel %vm523, %v610, 0
        %v617 = vsel %vm523, %v612, 0
        %619 = vmatpush.xpose.msra.mxu0 0.0
        %620 = vmatpush.xpose.msra.mxu0 0.0
        %621 = vmatpush.xpose.msra.mxu0 0.0
        %622 = vmatpush.xpose.msra.mxu0 0.0
        %623 = vmatpush.xpose.msra.mxu0 0.0
        %624 = vmatpush.xpose.msra.mxu0 0.0
        %625 = vmatpush.xpose.msra.mxu0 0.0
        %626 = vmatpush.xpose.msra.mxu0 0.0
        %627 = vmatpush.xpose.msra.mxu0 0.0
        %628 = vmatpush.xpose.msra.mxu0 0.0
        %629 = vmatpush.xpose.msra.mxu0 0.0
        %630 = vmatpush.xpose.msra.mxu0 0.0
        %631 = vmatpush.xpose.msra.mxu0 0.0
        %632 = vmatpush.xpose.msra.mxu0 0.0
        %633 = vmatpush.xpose.msra.mxu0 0.0
        %634 = vmatpush.xpose.msra.mxu0 %v617
        %635 = vmatmul.f32.gmra.mxu0 %v613
        %v636 = vpop.f32.mrf.mxu0
        %v637 = vadd.f32 0.0, %v636
        %638 = vmatmul.f32.gmra.mxu0 %v615
        %v639 = vpop.f32.mrf.mxu0
        %v640 = vadd.f32 0.0, %v639
        %641 = vdwg.mxu0
        %v642 = vsel %vm523, %v637, -inf
        %643 = vmax.xlane.f32.xlu0 %v642
        %v644 = vpop.xlane.xlu0 %643
        %v645 = vsel %vm523, %v640, -inf
        %646 = vmax.xlane.f32.xlu0 %v645
        %v647 = vpop.xlane.xlu0 %646
        %v648 = vsub.f32 %v637, %v644
        %v649 = vsub.f32 %v640, %v647
        %v650 = vmul.f32 %v648, 1.442695
        %v651 = vpow.pop %v650
        %v652 = vmul.f32 %v649, 1.442695
        %v653 = vpow.pop %v652
        %v654 = vsel %vm523, %v651, 0.0
        %655 = vadd.xlane.f32.xlu0 %v654
        %v656 = vpop.xlane.xlu0 %655
        %v657 = vsel %vm523, %v653, 0.0
        %658 = vadd.xlane.f32.xlu0 %v657
        %v659 = vpop.xlane.xlu0 %658
        %661 = vrot.lane.b32.xlu0 %v522, 120
        %v662 = vpop.permute.xlu0 %661
        %v665 = vsel %vm523, %v651, 0
        %v668 = vsel %vm523, %v653, 0
        %670 = vmatpush.msra.mxu0 0.0
        %671 = vmatpush.msra.mxu0 0.0
        %672 = vmatpush.msra.mxu0 0.0
        %673 = vmatpush.msra.mxu0 0.0
        %674 = vmatpush.msra.mxu0 0.0
        %675 = vmatpush.msra.mxu0 0.0
        %676 = vmatpush.msra.mxu0 0.0
        %677 = vmatpush.msra.mxu0 0.0
        %678 = vmatpush.msra.mxu0 0.0
        %679 = vmatpush.msra.mxu0 0.0
        %680 = vmatpush.msra.mxu0 0.0
        %681 = vmatpush.msra.mxu0 0.0
        %682 = vmatpush.msra.mxu0 0.0
        %683 = vmatpush.msra.mxu0 0.0
        %684 = vmatpush.msra.mxu0 0.0
        %685 = vmatpush.msra.mxu0 %v662
        %686 = vmatmul.f32.gmra.mxu0 %v665
        %v687 = vpop.f32.mrf.mxu0
        %v688 = vadd.f32 0.0, %v687
        %689 = vmatmul.f32.gmra.mxu0 %v668
        %v690 = vpop.f32.mrf.mxu0
        %v691 = vadd.f32 0.0, %v690
        %692 = vdwg.mxu0
        %v693 = vrcp.pop %v656
        %v694 = vrcp.pop %v659
        %v695 = vmul.f32 %v688, %v693
        %v696 = vmul.f32 %v691, %v694
        %697 = vrot.lane.b32.xlu0 %v519, 112
        %v698 = vpop.permute.xlu0 %697
        %699 = vrot.lane.b32.xlu0 %v520, 112
        %v700 = vpop.permute.xlu0 %699
        %701 = vrot.lane.b32.xlu0 %v521, 112
        %v702 = vpop.permute.xlu0 %701
        %v703 = vsel %vm523, %v698, 0
        %v705 = vsel %vm523, %v700, 0
        %v707 = vsel %vm523, %v702, 0
        %709 = vmatpush.xpose.msra.mxu0 0.0
        %710 = vmatpush.xpose.msra.mxu0 0.0
        %711 = vmatpush.xpose.msra.mxu0 0.0
        %712 = vmatpush.xpose.msra.mxu0 0.0
        %713 = vmatpush.xpose.msra.mxu0 0.0
        %714 = vmatpush.xpose.msra.mxu0 0.0
        %715 = vmatpush.xpose.msra.mxu0 0.0
        %716 = vmatpush.xpose.msra.mxu0 0.0
        %717 = vmatpush.xpose.msra.mxu0 0.0
        %718 = vmatpush.xpose.msra.mxu0 0.0
        %719 = vmatpush.xpose.msra.mxu0 0.0
        %720 = vmatpush.xpose.msra.mxu0 0.0
        %721 = vmatpush.xpose.msra.mxu0 0.0
        %722 = vmatpush.xpose.msra.mxu0 0.0
        %723 = vmatpush.xpose.msra.mxu0 0.0
        %724 = vmatpush.xpose.msra.mxu0 %v707
        %725 = vmatmul.f32.gmra.mxu0 %v703
        %v726 = vpop.f32.mrf.mxu0
        %v727 = vadd.f32 0.0, %v726
        %728 = vmatmul.f32.gmra.mxu0 %v705
        %v729 = vpop.f32.mrf.mxu0
        %v730 = vadd.f32 0.0, %v729
        %731 = vdwg.mxu0
        %v732 = vsel %vm523, %v727, -inf
        %733 = vmax.xlane.f32.xlu0 %v732
        %v734 = vpop.xlane.xlu0 %733
        %v735 = vsel %vm523, %v730, -inf
        %736 = vmax.xlane.f32.xlu0 %v735
        %v737 = vpop.xlane.xlu0 %736
        %v738 = vsub.f32 %v727, %v734
        %v739 = vsub.f32 %v730, %v737
        %v740 = vmul.f32 %v738, 1.442695
        %v741 = vpow.pop %v740
        %v742 = vmul.f32 %v739, 1.442695
        %v743 = vpow.pop %v742
        %v744 = vsel %vm523, %v741, 0.0
        %745 = vadd.xlane.f32.xlu0 %v744
        %v746 = vpop.xlane.xlu0 %745
        %v747 = vsel %vm523, %v743, 0.0
        %748 = vadd.xlane.f32.xlu0 %v747
        %v749 = vpop.xlane.xlu0 %748
        %750 = vrot.lane.b32.xlu0 %v522, 112
        %v751 = vpop.permute.xlu0 %750
        %v754 = vsel %vm523, %v741, 0
        %v757 = vsel %vm523, %v743, 0
        %759 = vmatpush.msra.mxu0 0.0
        %760 = vmatpush.msra.mxu0 0.0
        %761 = vmatpush.msra.mxu0 0.0
        %762 = vmatpush.msra.mxu0 0.0
        %763 = vmatpush.msra.mxu0 0.0
        %764 = vmatpush.msra.mxu0 0.0
        %765 = vmatpush.msra.mxu0 0.0
        %766 = vmatpush.msra.mxu0 0.0
        %767 = vmatpush.msra.mxu0 0.0
        %768 = vmatpush.msra.mxu0 0.0
        %769 = vmatpush.msra.mxu0 0.0
        %770 = vmatpush.msra.mxu0 0.0
        %771 = vmatpush.msra.mxu0 0.0
        %772 = vmatpush.msra.mxu0 0.0
        %773 = vmatpush.msra.mxu0 0.0
        %774 = vmatpush.msra.mxu0 %v751
        %775 = vmatmul.f32.gmra.mxu0 %v754
        %v776 = vpop.f32.mrf.mxu0
        %v777 = vadd.f32 0.0, %v776
        %778 = vmatmul.f32.gmra.mxu0 %v757
        %v779 = vpop.f32.mrf.mxu0
        %v780 = vadd.f32 0.0, %v779
        %781 = vdwg.mxu0
        %v782 = vrcp.pop %v746
        %v783 = vrcp.pop %v749
        %v784 = vmul.f32 %v777, %v782
        %v785 = vmul.f32 %v780, %v783
        %786 = vrot.lane.b32.xlu0 %v519, 104
        %v787 = vpop.permute.xlu0 %786
        %788 = vrot.lane.b32.xlu0 %v520, 104
        %v789 = vpop.permute.xlu0 %788
        %790 = vrot.lane.b32.xlu0 %v521, 104
        %v791 = vpop.permute.xlu0 %790
        %v792 = vsel %vm523, %v787, 0
        %v794 = vsel %vm523, %v789, 0
        %v796 = vsel %vm523, %v791, 0
        %798 = vmatpush.xpose.msra.mxu0 0.0
        %799 = vmatpush.xpose.msra.mxu0 0.0
        %800 = vmatpush.xpose.msra.mxu0 0.0
        %801 = vmatpush.xpose.msra.mxu0 0.0
        %802 = vmatpush.xpose.msra.mxu0 0.0
        %803 = vmatpush.xpose.msra.mxu0 0.0
        %804 = vmatpush.xpose.msra.mxu0 0.0
        %805 = vmatpush.xpose.msra.mxu0 0.0
        %806 = vmatpush.xpose.msra.mxu0 0.0
        %807 = vmatpush.xpose.msra.mxu0 0.0
        %808 = vmatpush.xpose.msra.mxu0 0.0
        %809 = vmatpush.xpose.msra.mxu0 0.0
        %810 = vmatpush.xpose.msra.mxu0 0.0
        %811 = vmatpush.xpose.msra.mxu0 0.0
        %812 = vmatpush.xpose.msra.mxu0 0.0
        %813 = vmatpush.xpose.msra.mxu0 %v796
        %814 = vmatmul.f32.gmra.mxu0 %v792
        %v815 = vpop.f32.mrf.mxu0
        %v816 = vadd.f32 0.0, %v815
        %817 = vmatmul.f32.gmra.mxu0 %v794
        %v818 = vpop.f32.mrf.mxu0
        %v819 = vadd.f32 0.0, %v818
        %820 = vdwg.mxu0
        %v821 = vsel %vm523, %v816, -inf
        %822 = vmax.xlane.f32.xlu0 %v821
        %v823 = vpop.xlane.xlu0 %822
        %v824 = vsel %vm523, %v819, -inf
        %825 = vmax.xlane.f32.xlu0 %v824
        %v826 = vpop.xlane.xlu0 %825
        %v827 = vsub.f32 %v816, %v823
        %v828 = vsub.f32 %v819, %v826
        %v829 = vmul.f32 %v827, 1.442695
        %v830 = vpow.pop %v829
        %v831 = vmul.f32 %v828, 1.442695
        %v832 = vpow.pop %v831
        %v833 = vsel %vm523, %v830, 0.0
        %834 = vadd.xlane.f32.xlu0 %v833
        %v835 = vpop.xlane.xlu0 %834
        %v836 = vsel %vm523, %v832, 0.0
        %837 = vadd.xlane.f32.xlu0 %v836
        %v838 = vpop.xlane.xlu0 %837
        %839 = vrot.lane.b32.xlu0 %v522, 104
        %v840 = vpop.permute.xlu0 %839
        %v843 = vsel %vm523, %v830, 0
        %v846 = vsel %vm523, %v832, 0
        %848 = vmatpush.msra.mxu0 0.0
        %849 = vmatpush.msra.mxu0 0.0
        %850 = vmatpush.msra.mxu0 0.0
        %851 = vmatpush.msra.mxu0 0.0
        %852 = vmatpush.msra.mxu0 0.0
        %853 = vmatpush.msra.mxu0 0.0
        %854 = vmatpush.msra.mxu0 0.0
        %855 = vmatpush.msra.mxu0 0.0
        %856 = vmatpush.msra.mxu0 0.0
        %857 = vmatpush.msra.mxu0 0.0
        %858 = vmatpush.msra.mxu0 0.0
        %859 = vmatpush.msra.mxu0 0.0
        %860 = vmatpush.msra.mxu0 0.0
        %861 = vmatpush.msra.mxu0 0.0
        %862 = vmatpush.msra.mxu0 0.0
        %863 = vmatpush.msra.mxu0 %v840
        %864 = vmatmul.f32.gmra.mxu0 %v843
        %v865 = vpop.f32.mrf.mxu0
        %v866 = vadd.f32 0.0, %v865
        %867 = vmatmul.f32.gmra.mxu0 %v846
        %v868 = vpop.f32.mrf.mxu0
        %v869 = vadd.f32 0.0, %v868
        %870 = vdwg.mxu0
        %v871 = vrcp.pop %v835
        %v872 = vrcp.pop %v838
        %v873 = vmul.f32 %v866, %v871
        %v874 = vmul.f32 %v869, %v872
        %877 = vrot.lane.b32.xlu0 %v695, 8
        %v878 = vpop.permute.xlu0 %877
        %879 = vrot.lane.b32.xlu0 %v696, 8
        %v880 = vpop.permute.xlu0 %879
        %885 = vrot.lane.b32.xlu0 %v784, 16
        %v886 = vpop.permute.xlu0 %885
        %887 = vrot.lane.b32.xlu0 %v785, 16
        %v888 = vpop.permute.xlu0 %887
        %893 = vrot.lane.b32.xlu0 %v873, 24
        %v894 = vpop.permute.xlu0 %893
        %895 = vrot.lane.b32.xlu0 %v874, 24
        %v896 = vpop.permute.xlu0 %895
        %v899 = vsel %vm523, %v605, %v878
        %v900 = vsel %vm523, %v606, %v880
        %vm901 = vcmask 130048
        %v902 = vsel %vm901, %v899, %v886
        %v903 = vsel %vm901, %v900, %v888
        %vm904 = vcmask 195584
        %v905 = vsel %vm904, %v902, %v894
        %v906 = vsel %vm904, %v903, %v896
        %v907 = vld [vmem:[#allocation13] sm:$0xff]
        %v908 = vld [vmem:[#allocation13 + $0x8] sm:$0xff]
        %v909 = vld [vmem:[#allocation13 + $0x10] sm:$0xff]
        %v910 = vld [vmem:[#allocation13 + $0x18] sm:$0xff]
        %v911 = vld [vmem:[%s6] sm:$0x1]
        %v913 = vperm.slane %v911, 0
        %v916 = vsel %vm489, %v905, 0
        %v919 = vsel %vm489, %v906, 0
        %921 = vmatpush.msra.mxu0 0.0
        %922 = vmatpush.msra.mxu0 0.0
        %923 = vmatpush.msra.mxu0 0.0
        %924 = vmatpush.msra.mxu0 0.0
        %925 = vmatpush.msra.mxu0 0.0
        %926 = vmatpush.msra.mxu0 0.0
        %927 = vmatpush.msra.mxu0 0.0
        %928 = vmatpush.msra.mxu0 0.0
        %929 = vmatpush.msra.mxu0 0.0
        %930 = vmatpush.msra.mxu0 0.0
        %931 = vmatpush.msra.mxu0 0.0
        %932 = vmatpush.msra.mxu0 0.0
        %933 = vmatpush.msra.mxu0 %v910
        %934 = vmatpush.msra.mxu0 %v909
        %935 = vmatpush.msra.mxu0 %v908
        %936 = vmatpush.msra.mxu0 %v907
        %937 = vmatmul.f32.gmra.mxu0 %v916
        %v938 = vpop.f32.mrf.mxu0
        %v939 = vadd.f32 %v913, %v938
        %940 = vmatmul.f32.gmra.mxu0 %v919
        %v941 = vpop.f32.mrf.mxu0
        %v942 = vadd.f32 %v913, %v941
        %943 = vdwg.mxu0
        %944 = vst.msk [vmem:[%s421] sm:$0xff] %vm489, %v939
        %945 = vst.msk [vmem:[%s421 + $0x8] sm:$0xff] %vm489, %v942
        %s946 = sand.u32 %s210, 1
        %s947 = scalar_lea.sflag [#allocation6], %s946
        %s948 = sand.u32 %s210, 1
        %s949 = smul.addr %s948, 16
        %s950 = scalar_lea.vmem [#allocation15], %s949
        // Predicated region
        $region77: #{tpu_custom_call.1} parent=47 // pred_check
          %p951 = pneg %p220
        $region78: #{tpu_custom_call.1} parent=47 // pred_check_branch
          %953 = sbr.rel (%p951) target = $region80
        $region79: #{tpu_custom_call.1} parent=47 // pred_region
          %s954 = smul.u32 2, %s34
          %956 = vsyncadd %s947, 0
          %s957 = smul.addr %s33, 2
          %s958 = sadd.s32 %s954, %s957
          %s959 = smul.addr %s958, 8
          %s960 = scalar_lea.hbm %s7, %s959
          %s961 = sshll.u32 %s950, 4
          %s962 = int_to_ptr.vmem [resolvable:$true] %s961
          %s963 = sshll.u32 %s960, 4
          %s964 = int_to_ptr.hbm [resolvable:$true] %s963
          %969 = dma.vmem_to_hbm [thread:$0]  %s962, 256, %s964, %s947, 128, 128, 8
        $region80: #{tpu_custom_call.1} parent=47 // pred_fallthru
          _
      $region48: #{tpu_custom_call.1} parent=5 // pred_fallthru
        _
      %p970 = scmp.le.s32.totalorder 2, %s24
      // Predicated region
      $region81: #{tpu_custom_call.1} parent=5 // pred_check
        %p971 = pneg %p970
      $region82: #{tpu_custom_call.1} parent=5 // pred_check_branch
        %973 = sbr.rel (%p971) target = $region84
      $region83: #{tpu_custom_call.1} parent=5 // pred_region
        %s974 = ssub.s32 %s24, 2
        // Predicated region
        $region85: #{tpu_custom_call.1} parent=83 // pred_check
          %p975 = pneg %p226
        $region86: #{tpu_custom_call.1} parent=83 // pred_check_branch
          %977 = sbr.rel (%p975) target = $region88
        $region87: #{tpu_custom_call.1} parent=83 // pred_region
          %s978 = sand.u32 %s211, 1
          %s979 = scalar_lea.sflag [#allocation6], %s978
          %s980 = sand.u32 %s211, 1
          %s981 = smul.addr %s980, 16
          %s982 = scalar_lea.vmem [#allocation15], %s981
          %984 = dma.done %s979, 256
        $region88: #{tpu_custom_call.1} parent=83 // pred_fallthru
          _
      $region84: #{tpu_custom_call.1} parent=5 // pred_fallthru
        _
    $region6: #{tpu_custom_call.1} parent=1 // loop_footer
      %s28 = sadd.s32 1, %s24
    $region7: #{tpu_custom_call.1} parent=1 // loop_footer_branch
      %23 = sbr.rel target = $region3
    $region8: #{tpu_custom_call.1} parent=1 // loop_exit
      _
    %985 = vsyncpa [#allocation5], 1
    %s986 = scalar_lea.sflag [#allocation5], 1
    %987 = vsyncpa %s986, 1
    %988 = vsyncpa [#allocation8], 1
    %s989 = scalar_lea.sflag [#allocation8], 1
    %990 = vsyncpa %s989, 1
    %991 = vsyncpa [#allocation11], 1
    %992 = vsyncpa [#allocation14], 1
    %993 = vsyncpa [#allocation6], 1
    %s994 = scalar_lea.sflag [#allocation6], 1
    %995 = vsyncpa %s994, 1

</llo_original>
